<compile_context>
chip_gen: v6e
topology: v6e:2x2x1
jax: 0.10.0
libtpu: 0.0.40
codegen_flags: <defaults>
</compile_context>

<pallas_src>
import functools

import jax
import jax.numpy as jnp
from jax import lax
from jax.experimental import pallas as pl
from jax.experimental.pallas import tpu as pltpu


# ------------------------------------------------------------------
# Fused encoder kernel
# ------------------------------------------------------------------
def _encoder_kernel(x_ref, src_ref, dst_ref, ea_ref,
                    w1a_ref, b1a_ref, w2a_ref, b2a_ref,     # fused 3-way edge MLP
                    wr1_ref, br1_ref, t1_ref, r1_ref,        # conv1 root / expand-reduce
                    wrf_ref, brf_ref, t2f_ref, r2f_ref,      # fused mu|logvar root / expand-reduce
                    out_ref, *, k1):
    f32 = jnp.float32
    x = x_ref[...]                  # [N, in]
    ea = ea_ref[...]                # [E, ef]
    N = x.shape[0]
    E = ea.shape[0]

    # One-hot gather/scatter masks built in-kernel from int32 edge indices.
    gather_src = (lax.broadcasted_iota(jnp.int32, (E, N), 1)
                  == src_ref[...]).astype(f32)                          # [E, N]
    scat_dst = (lax.broadcasted_iota(jnp.int32, (N, E), 0)
                == dst_ref[...]).astype(f32)                            # [N, E]
    inv_deg = 1.0 / jnp.maximum(jnp.sum(scat_dst, axis=1, keepdims=True), 1.0)  # [N, 1]

    # ------- fused edge MLP for conv1 + conv_mu + conv_logvar -------
    h1_all = jnp.maximum(jnp.dot(ea, w1a_ref[...], preferred_element_type=f32)
                         + b1a_ref[...], 0.0)                           # [E, 3*he]
    theta_all = (jnp.dot(h1_all, w2a_ref[...], preferred_element_type=f32)
                 + b2a_ref[...])                                        # [E, in*hid + 2*hid*lat]
    theta1 = theta_all[:, :k1]                                          # [E, in*hid]
    thetaf = theta_all[:, k1:]                                          # [E, 2*hid*lat] = [mu | lv]

    # ---------------- conv1 (NNConv, aggr='mean') + ReLU ----------------
    x_src = jnp.dot(gather_src, x, preferred_element_type=f32)          # [E, in]
    x_exp = jnp.dot(x_src, t1_ref[...], preferred_element_type=f32)     # [E, in*hid]
    msg1 = jnp.dot(x_exp * theta1, r1_ref[...],
                   preferred_element_type=f32)                          # [E, hid]
    agg1 = jnp.dot(scat_dst, msg1, preferred_element_type=f32) * inv_deg  # [N, hid]
    h = jnp.maximum(agg1 + jnp.dot(x, wr1_ref[...], preferred_element_type=f32)
                    + br1_ref[...], 0.0)                                # [N, hid]
    # TODO(synk): nn.Dropout(0.2) is identity in eval mode; not applied.

    # --------- fused conv_mu / conv_logvar (NNConv, aggr='sum') ----------
    h_src = jnp.dot(gather_src, h, preferred_element_type=f32)          # [E, hid]
    h_exp = jnp.dot(h_src, t2f_ref[...], preferred_element_type=f32)    # [E, 2*hid*lat]
    msgf = jnp.dot(h_exp * thetaf, r2f_ref[...],
                   preferred_element_type=f32)                          # [E, 2*lat] = [msg_mu | msg_lv]
    aggf = jnp.dot(scat_dst, msgf, preferred_element_type=f32)          # [N, 2*lat]

    out_ref[...] = aggf + jnp.dot(h, wrf_ref[...], preferred_element_type=f32) + brf_ref[...]


# ------------------------------------------------------------------
# Wrapper: parameter fusion + constant expand/reduce matrices + pallas_call
# ------------------------------------------------------------------
def _expand_reduce(in_dim, out_dim, copies):
    """T: [in, copies*in*out] expand matrix; R: [copies*in*out, copies*out] block-reduce."""
    K = in_dim * out_dim
    j = jnp.arange(copies * K)
    jj = j % K
    T = (jnp.arange(in_dim)[:, None] == (jj // out_dim)[None, :]).astype(jnp.float32)
    c = (j // K) * out_dim + (jj % out_dim)
    R = (c[:, None] == jnp.arange(copies * out_dim)[None, :]).astype(jnp.float32)
    return T, R


def vgae_encoder_forward(params, x, edge_index, edge_attr):
    N, in_dim = x.shape
    E = edge_attr.shape[0]
    p1, pmu, plv = params["conv1"], params["conv_mu"], params["conv_logvar"]
    hid = p1["wroot"].shape[1]
    lat = pmu["wroot"].shape[1]
    he = p1["w1"].shape[1]
    k1 = in_dim * hid
    k2 = hid * lat

    src = edge_index[0].astype(jnp.int32).reshape(E, 1)   # lane-broadcast vs (E,N) iota
    dst = edge_index[1].astype(jnp.int32).reshape(1, E)   # sublane-broadcast vs (N,E) iota

    # ---- fuse all three edge MLPs into one pair of matmuls ----
    # First layers: concat columns.  Second layers: block-diagonal.
    w1a = jnp.concatenate([p1["w1"], pmu["w1"], plv["w1"]], axis=1)       # [ef, 3*he]
    b1a = jnp.concatenate([p1["b1"], pmu["b1"], plv["b1"]], axis=1)       # [1, 3*he]

    def _blkdiag3(a, b, c):
        za_b = jnp.zeros((a.shape[0], b.shape[1]), jnp.float32)
        za_c = jnp.zeros((a.shape[0], c.shape[1]), jnp.float32)
        zb_a = jnp.zeros((b.shape[0], a.shape[1]), jnp.float32)
        zb_c = jnp.zeros((b.shape[0], c.shape[1]), jnp.float32)
        zc_a = jnp.zeros((c.shape[0], a.shape[1]), jnp.float32)
        zc_b = jnp.zeros((c.shape[0], b.shape[1]), jnp.float32)
        return jnp.concatenate([
            jnp.concatenate([a,    za_b, za_c], axis=1),
            jnp.concatenate([zb_a, b,    zb_c], axis=1),
            jnp.concatenate([zc_a, zc_b, c   ], axis=1),
        ], axis=0)

    w2a = _blkdiag3(p1["w2"], pmu["w2"], plv["w2"])                       # [3*he, k1 + 2*k2]
    b2a = jnp.concatenate([p1["b2"], pmu["b2"], plv["b2"]], axis=1)       # [1, k1 + 2*k2]

    # ---- fuse conv_mu / conv_logvar roots along the output-column axis ----
    wrf = jnp.concatenate([pmu["wroot"], plv["wroot"]], axis=1)           # [hid, 2*lat]
    brf = jnp.concatenate([pmu["broot"], plv["broot"]], axis=1)           # [1, 2*lat]

    t1, r1 = _expand_reduce(in_dim, hid, copies=1)
    t2f, r2f = _expand_reduce(hid, lat, copies=2)

    vmem = pl.BlockSpec(memory_space=pltpu.MemorySpace.VMEM)
    out = pl.pallas_call(
        functools.partial(_encoder_kernel, k1=k1),
        out_shape=jax.ShapeDtypeStruct((N, 2 * lat), jnp.float32),
        in_specs=[vmem] * 16,
        out_specs=vmem,
    )(x, src, dst, edge_attr,
      w1a, b1a, w2a, b2a,
      p1["wroot"], p1["broot"], t1, r1,
      wrf, brf, t2f, r2f)

    mu = out[:, :lat]
    logvar = out[:, lat:]
    return mu, logvar


# ------------------------------------------------------------------
# Parameter initialization (deterministic, synthetic)
# ------------------------------------------------------------------
def _glorot(key, shape):
    fan_in, fan_out = shape[0], shape[1]
    lim = (6.0 / (fan_in + fan_out)) ** 0.5
    return jax.random.uniform(key, shape, jnp.float32, -lim, lim)


def init_nnconv_params(key, in_dim, out_dim, edge_feat_dim, hid_edge_nn_dim):
    ks = jax.random.split(key, 4)
    return dict(
        w1=_glorot(ks[0], (edge_feat_dim, hid_edge_nn_dim)),
        b1=jnp.zeros((1, hid_edge_nn_dim), jnp.float32),
        w2=_glorot(ks[1], (hid_edge_nn_dim, in_dim * out_dim)),
        b2=jnp.zeros((1, in_dim * out_dim), jnp.float32),
        wroot=_glorot(ks[2], (in_dim, out_dim)),
        broot=0.01 * jax.random.normal(ks[3], (1, out_dim), jnp.float32),
    )


def init_encoder_params(key, in_dim, hid_dim, lat_dim, edge_feat_dim, hid_edge_nn_dim=32):
    ks = jax.random.split(key, 3)
    return dict(
        conv1=init_nnconv_params(ks[0], in_dim, hid_dim, edge_feat_dim, hid_edge_nn_dim),
        conv_mu=init_nnconv_params(ks[1], hid_dim, lat_dim, edge_feat_dim, hid_edge_nn_dim),
        conv_logvar=init_nnconv_params(ks[2], hid_dim, lat_dim, edge_feat_dim, hid_edge_nn_dim),
    )


# ------------------------------------------------------------------
# Pure-JAX reference (PyG NNConv semantics) for validation
# ------------------------------------------------------------------
def _nnconv_ref(x, src, dst, edge_attr, p, aggr, N):
    E = edge_attr.shape[0]
    in_dim = x.shape[1]
    out_dim = p["wroot"].shape[1]
    h1 = jnp.maximum(edge_attr @ p["w1"] + p["b1"], 0.0)
    theta = (h1 @ p["w2"] + p["b2"]).reshape(E, in_dim, out_dim)
    msg = jnp.einsum("ei,eio->eo", x[src], theta)
    agg = jnp.zeros((N, out_dim), jnp.float32).at[dst].add(msg)
    if aggr == "mean":
        deg = jnp.zeros((N,), jnp.float32).at[dst].add(1.0)
        agg = agg / jnp.maximum(deg, 1.0)[:, None]
    return agg + x @ p["wroot"] + p["broot"]


def encoder_ref(params, x, edge_index, edge_attr):
    N = x.shape[0]
    src, dst = edge_index[0], edge_index[1]
    h = jnp.maximum(_nnconv_ref(x, src, dst, edge_attr, params["conv1"], "mean", N), 0.0)
    mu = _nnconv_ref(h, src, dst, edge_attr, params["conv_mu"], "sum", N)
    logvar = _nnconv_ref(h, src, dst, edge_attr, params["conv_logvar"], "sum", N)
    return mu, logvar


# ------------------------------------------------------------------
if __name__ == "__main__":
    import numpy as np

    in_dim, hid_dim, lat_dim, edge_feat_dim, hid_edge = 8, 16, 8, 4, 32
    N, E = 16, 32

    key = jax.random.PRNGKey(0)
    k_x, k_ea, k_src, k_dst, k_par = jax.random.split(key, 5)

    x = jax.random.normal(k_x, (N, in_dim), jnp.float32)
    edge_attr = jax.random.normal(k_ea, (E, edge_feat_dim), jnp.float32)
    src = jax.random.randint(k_src, (E,), 0, N, jnp.int32)
    dst = jax.random.randint(k_dst, (E,), 0, N, jnp.int32)
    edge_index = jnp.stack([src, dst], axis=0)

    params = init_encoder_params(k_par, in_dim, hid_dim, lat_dim, edge_feat_dim, hid_edge)

    fwd = jax.jit(vgae_encoder_forward)
    mu, logvar = fwd(params, x, edge_index, edge_attr)
    jax.block_until_ready((mu, logvar))

    assert mu.shape == (N, lat_dim) and logvar.shape == (N, lat_dim)

    mu_ref, lv_ref = encoder_ref(params, x, edge_index, edge_attr)
    np.testing.assert_allclose(np.asarray(mu), np.asarray(mu_ref), rtol=5e-2, atol=5e-2)
    np.testing.assert_allclose(np.asarray(logvar), np.asarray(lv_ref), rtol=5e-2, atol=5e-2)

    print("KERNEL_OK")
</pallas_src>

<mosaic_0001>
module attributes {stable_mosaic.version = 11 : i64} {
  func.func @_encoder_kernel(%arg0: memref<16x8xf32, #tpu.memory_space<vmem>>, %arg1: memref<32x1xi32, #tpu.memory_space<vmem>>, %arg2: memref<1x32xi32, #tpu.memory_space<vmem>>, %arg3: memref<32x4xf32, #tpu.memory_space<vmem>>, %arg4: memref<4x96xf32, #tpu.memory_space<vmem>>, %arg5: memref<1x96xf32, #tpu.memory_space<vmem>>, %arg6: memref<96x384xf32, #tpu.memory_space<vmem>>, %arg7: memref<1x384xf32, #tpu.memory_space<vmem>>, %arg8: memref<8x16xf32, #tpu.memory_space<vmem>>, %arg9: memref<1x16xf32, #tpu.memory_space<vmem>>, %arg10: memref<8x128xf32, #tpu.memory_space<vmem>>, %arg11: memref<128x16xf32, #tpu.memory_space<vmem>>, %arg12: memref<16x16xf32, #tpu.memory_space<vmem>>, %arg13: memref<1x16xf32, #tpu.memory_space<vmem>>, %arg14: memref<16x256xf32, #tpu.memory_space<vmem>>, %arg15: memref<256x16xf32, #tpu.memory_space<vmem>>, %arg16: memref<16x16xf32, #tpu.memory_space<vmem>>) attributes {dimension_semantics = [], scalar_prefetch = 0 : i64, scratch_operands = 0 : i64, tpu.core_type = #tpu.core_type<tc>} {
    %c0 = arith.constant 0 : index
    %c0_0 = arith.constant 0 : index
    %0 = vector.load %arg0[%c0, %c0_0] : memref<16x8xf32, #tpu.memory_space<vmem>>, vector<16x8xf32>
    %c0_1 = arith.constant 0 : index
    %c0_2 = arith.constant 0 : index
    %1 = vector.load %arg3[%c0_1, %c0_2] : memref<32x4xf32, #tpu.memory_space<vmem>>, vector<32x4xf32>
    %2 = tpu.iota {dimensions = array<i32: 1>} : vector<32x16xi32>
    %c0_3 = arith.constant 0 : index
    %c0_4 = arith.constant 0 : index
    %3 = vector.load %arg1[%c0_3, %c0_4] : memref<32x1xi32, #tpu.memory_space<vmem>>, vector<32x1xi32>
    %4 = vector.broadcast %3 : vector<32x1xi32> to vector<32x16xi32>
    %5 = arith.cmpi eq, %2, %4 : vector<32x16xi32>
    %6 = arith.extui %5 : vector<32x16xi1> to vector<32x16xi32>
    %7 = arith.sitofp %6 : vector<32x16xi32> to vector<32x16xf32>
    %8 = tpu.iota {dimensions = array<i32: 0>} : vector<16x32xi32>
    %c0_5 = arith.constant 0 : index
    %c0_6 = arith.constant 0 : index
    %9 = vector.load %arg2[%c0_5, %c0_6] : memref<1x32xi32, #tpu.memory_space<vmem>>, vector<1x32xi32>
    %10 = vector.broadcast %9 : vector<1x32xi32> to vector<16x32xi32>
    %11 = arith.cmpi eq, %8, %10 : vector<16x32xi32>
    %12 = arith.extui %11 : vector<16x32xi1> to vector<16x32xi32>
    %13 = arith.sitofp %12 : vector<16x32xi32> to vector<16x32xf32>
    %cst = arith.constant dense<0.000000e+00> : vector<16xf32>
    %14 = vector.multi_reduction <add>, %13, %cst [1] : vector<16x32xf32> to vector<16xf32>
    %15 = vector.shape_cast %14 : vector<16xf32> to vector<16x1xf32>
    %cst_7 = arith.constant 1.000000e+00 : f32
    %16 = vector.broadcast %cst_7 : f32 to vector<16x1xf32>
    %17 = arith.maximumf %15, %16 : vector<16x1xf32>
    %cst_8 = arith.constant 1.000000e+00 : f32
    %18 = vector.broadcast %cst_8 : f32 to vector<16x1xf32>
    %19 = arith.divf %18, %17 : vector<16x1xf32>
    %c0_9 = arith.constant 0 : index
    %c0_10 = arith.constant 0 : index
    %20 = vector.load %arg4[%c0_9, %c0_10] : memref<4x96xf32, #tpu.memory_space<vmem>>, vector<4x96xf32>
    %cst_11 = arith.constant dense<0.000000e+00> : vector<32x96xf32>
    %21 = tpu.matmul %1, %20, %cst_11 {dimension_numbers = #tpu.dot_dimension_numbers<[1], [0], [0], [1], [0, 0, 1, 1], [], []>} : vector<32x4xf32>, vector<4x96xf32>, vector<32x96xf32> -> vector<32x96xf32>
    %c0_12 = arith.constant 0 : index
    %c0_13 = arith.constant 0 : index
    %22 = vector.load %arg5[%c0_12, %c0_13] : memref<1x96xf32, #tpu.memory_space<vmem>>, vector<1x96xf32>
    %23 = vector.broadcast %22 : vector<1x96xf32> to vector<32x96xf32>
    %24 = arith.addf %21, %23 : vector<32x96xf32>
    %cst_14 = arith.constant 0.000000e+00 : f32
    %25 = vector.broadcast %cst_14 : f32 to vector<32x96xf32>
    %26 = arith.maximumf %24, %25 : vector<32x96xf32>
    %c0_15 = arith.constant 0 : index
    %c0_16 = arith.constant 0 : index
    %27 = vector.load %arg6[%c0_15, %c0_16] : memref<96x384xf32, #tpu.memory_space<vmem>>, vector<96x384xf32>
    %cst_17 = arith.constant dense<0.000000e+00> : vector<32x384xf32>
    %28 = tpu.matmul %26, %27, %cst_17 {dimension_numbers = #tpu.dot_dimension_numbers<[1], [0], [0], [1], [0, 0, 1, 1], [], []>} : vector<32x96xf32>, vector<96x384xf32>, vector<32x384xf32> -> vector<32x384xf32>
    %c0_18 = arith.constant 0 : index
    %c0_19 = arith.constant 0 : index
    %29 = vector.load %arg7[%c0_18, %c0_19] : memref<1x384xf32, #tpu.memory_space<vmem>>, vector<1x384xf32>
    %30 = vector.broadcast %29 : vector<1x384xf32> to vector<32x384xf32>
    %31 = arith.addf %28, %30 : vector<32x384xf32>
    %32 = vector.extract_strided_slice %31 {offsets = [0, 0], sizes = [32, 128], strides = [1, 1]} : vector<32x384xf32> to vector<32x128xf32>
    %33 = vector.extract_strided_slice %31 {offsets = [0, 128], sizes = [32, 256], strides = [1, 1]} : vector<32x384xf32> to vector<32x256xf32>
    %cst_20 = arith.constant dense<0.000000e+00> : vector<32x8xf32>
    %34 = tpu.matmul %7, %0, %cst_20 {dimension_numbers = #tpu.dot_dimension_numbers<[1], [0], [0], [1], [0, 0, 1, 1], [], []>} : vector<32x16xf32>, vector<16x8xf32>, vector<32x8xf32> -> vector<32x8xf32>
    %c0_21 = arith.constant 0 : index
    %c0_22 = arith.constant 0 : index
    %35 = vector.load %arg10[%c0_21, %c0_22] : memref<8x128xf32, #tpu.memory_space<vmem>>, vector<8x128xf32>
    %cst_23 = arith.constant dense<0.000000e+00> : vector<32x128xf32>
    %36 = tpu.matmul %34, %35, %cst_23 {dimension_numbers = #tpu.dot_dimension_numbers<[1], [0], [0], [1], [0, 0, 1, 1], [], []>} : vector<32x8xf32>, vector<8x128xf32>, vector<32x128xf32> -> vector<32x128xf32>
    %37 = arith.mulf %36, %32 : vector<32x128xf32>
    %c0_24 = arith.constant 0 : index
    %c0_25 = arith.constant 0 : index
    %38 = vector.load %arg11[%c0_24, %c0_25] : memref<128x16xf32, #tpu.memory_space<vmem>>, vector<128x16xf32>
    %cst_26 = arith.constant dense<0.000000e+00> : vector<32x16xf32>
    %39 = tpu.matmul %37, %38, %cst_26 {dimension_numbers = #tpu.dot_dimension_numbers<[1], [0], [0], [1], [0, 0, 1, 1], [], []>} : vector<32x128xf32>, vector<128x16xf32>, vector<32x16xf32> -> vector<32x16xf32>
    %cst_27 = arith.constant dense<0.000000e+00> : vector<16x16xf32>
    %40 = tpu.matmul %13, %39, %cst_27 {dimension_numbers = #tpu.dot_dimension_numbers<[1], [0], [0], [1], [0, 0, 1, 1], [], []>} : vector<16x32xf32>, vector<32x16xf32>, vector<16x16xf32> -> vector<16x16xf32>
    %41 = vector.broadcast %19 : vector<16x1xf32> to vector<16x16xf32>
    %42 = arith.mulf %40, %41 : vector<16x16xf32>
    %c0_28 = arith.constant 0 : index
    %c0_29 = arith.constant 0 : index
    %43 = vector.load %arg8[%c0_28, %c0_29] : memref<8x16xf32, #tpu.memory_space<vmem>>, vector<8x16xf32>
    %cst_30 = arith.constant dense<0.000000e+00> : vector<16x16xf32>
    %44 = tpu.matmul %0, %43, %cst_30 {dimension_numbers = #tpu.dot_dimension_numbers<[1], [0], [0], [1], [0, 0, 1, 1], [], []>} : vector<16x8xf32>, vector<8x16xf32>, vector<16x16xf32> -> vector<16x16xf32>
    %45 = arith.addf %42, %44 : vector<16x16xf32>
    %c0_31 = arith.constant 0 : index
    %c0_32 = arith.constant 0 : index
    %46 = vector.load %arg9[%c0_31, %c0_32] : memref<1x16xf32, #tpu.memory_space<vmem>>, vector<1x16xf32>
    %47 = vector.broadcast %46 : vector<1x16xf32> to vector<16x16xf32>
    %48 = arith.addf %45, %47 : vector<16x16xf32>
    %cst_33 = arith.constant 0.000000e+00 : f32
    %49 = vector.broadcast %cst_33 : f32 to vector<16x16xf32>
    %50 = arith.maximumf %48, %49 : vector<16x16xf32>
    %cst_34 = arith.constant dense<0.000000e+00> : vector<32x16xf32>
    %51 = tpu.matmul %7, %50, %cst_34 {dimension_numbers = #tpu.dot_dimension_numbers<[1], [0], [0], [1], [0, 0, 1, 1], [], []>} : vector<32x16xf32>, vector<16x16xf32>, vector<32x16xf32> -> vector<32x16xf32>
    %c0_35 = arith.constant 0 : index
    %c0_36 = arith.constant 0 : index
    %52 = vector.load %arg14[%c0_35, %c0_36] : memref<16x256xf32, #tpu.memory_space<vmem>>, vector<16x256xf32>
    %cst_37 = arith.constant dense<0.000000e+00> : vector<32x256xf32>
    %53 = tpu.matmul %51, %52, %cst_37 {dimension_numbers = #tpu.dot_dimension_numbers<[1], [0], [0], [1], [0, 0, 1, 1], [], []>} : vector<32x16xf32>, vector<16x256xf32>, vector<32x256xf32> -> vector<32x256xf32>
    %54 = arith.mulf %53, %33 : vector<32x256xf32>
    %c0_38 = arith.constant 0 : index
    %c0_39 = arith.constant 0 : index
    %55 = vector.load %arg15[%c0_38, %c0_39] : memref<256x16xf32, #tpu.memory_space<vmem>>, vector<256x16xf32>
    %cst_40 = arith.constant dense<0.000000e+00> : vector<32x16xf32>
    %56 = tpu.matmul %54, %55, %cst_40 {dimension_numbers = #tpu.dot_dimension_numbers<[1], [0], [0], [1], [0, 0, 1, 1], [], []>} : vector<32x256xf32>, vector<256x16xf32>, vector<32x16xf32> -> vector<32x16xf32>
    %cst_41 = arith.constant dense<0.000000e+00> : vector<16x16xf32>
    %57 = tpu.matmul %13, %56, %cst_41 {dimension_numbers = #tpu.dot_dimension_numbers<[1], [0], [0], [1], [0, 0, 1, 1], [], []>} : vector<16x32xf32>, vector<32x16xf32>, vector<16x16xf32> -> vector<16x16xf32>
    %c0_42 = arith.constant 0 : index
    %c0_43 = arith.constant 0 : index
    %58 = vector.load %arg12[%c0_42, %c0_43] : memref<16x16xf32, #tpu.memory_space<vmem>>, vector<16x16xf32>
    %cst_44 = arith.constant dense<0.000000e+00> : vector<16x16xf32>
    %59 = tpu.matmul %50, %58, %cst_44 {dimension_numbers = #tpu.dot_dimension_numbers<[1], [0], [0], [1], [0, 0, 1, 1], [], []>} : vector<16x16xf32>, vector<16x16xf32>, vector<16x16xf32> -> vector<16x16xf32>
    %60 = arith.addf %57, %59 : vector<16x16xf32>
    %c0_45 = arith.constant 0 : index
    %c0_46 = arith.constant 0 : index
    %61 = vector.load %arg13[%c0_45, %c0_46] : memref<1x16xf32, #tpu.memory_space<vmem>>, vector<1x16xf32>
    %62 = vector.broadcast %61 : vector<1x16xf32> to vector<16x16xf32>
    %63 = arith.addf %60, %62 : vector<16x16xf32>
    %c0_47 = arith.constant 0 : index
    %c0_48 = arith.constant 0 : index
    %64 = vector.load %arg16[%c0_47, %c0_48] : memref<16x16xf32, #tpu.memory_space<vmem>>, vector<16x16xf32>
    tpu.vector_store %arg16[%c0_47, %c0_48], %63 {strides = array<i32>} : memref<16x16xf32, #tpu.memory_space<vmem>>, vector<16x16xf32>,
    return
  }
}

</mosaic_0001>

<llo_original>
// kernel: vgae_encoder_forward.1
$region0: #{vgae_encoder_forward.1}
  #allocation0 [shape = 'u32[]', space=smem, size = 0x4, offset = 0x4, fixed_abs, tag = 'smem constant byte address 0x4 - core index']
  #allocation1 [shape = 'u32[144,128]{1,0:T(1,128)}', space=vmem, size = 0x12000, scoped, tag = 'internal scratch']
  %s0 = inlined_call_operand.vmem [shape: f32[16,8], index: 0, kind: input, shape index: {}]
  %s1 = inlined_call_operand.vmem [shape: s32[32,1], index: 1, kind: input, shape index: {}]
  %s2 = inlined_call_operand.vmem [shape: s32[1,32], index: 2, kind: input, shape index: {}]
  %s3 = inlined_call_operand.vmem [shape: f32[32,4], index: 3, kind: input, shape index: {}]
  %s4 = inlined_call_operand.vmem [shape: f32[4,96], index: 4, kind: input, shape index: {}]
  %s5 = inlined_call_operand.vmem [shape: f32[1,96], index: 5, kind: input, shape index: {}]
  %s6 = inlined_call_operand.vmem [shape: f32[96,384], index: 6, kind: input, shape index: {}]
  %s7 = inlined_call_operand.vmem [shape: f32[1,384], index: 7, kind: input, shape index: {}]
  %s8 = inlined_call_operand.vmem [shape: f32[8,16], index: 8, kind: input, shape index: {}]
  %s9 = inlined_call_operand.vmem [shape: f32[1,16], index: 9, kind: input, shape index: {}]
  %s10 = inlined_call_operand.vmem [shape: f32[8,128], index: 10, kind: input, shape index: {}]
  %s11 = inlined_call_operand.vmem [shape: f32[128,16], index: 11, kind: input, shape index: {}]
  %s12 = inlined_call_operand.vmem [shape: f32[16,16], index: 12, kind: input, shape index: {}]
  %s13 = inlined_call_operand.vmem [shape: f32[1,16], index: 13, kind: input, shape index: {}]
  %s14 = inlined_call_operand.vmem [shape: f32[16,256], index: 14, kind: input, shape index: {}]
  %s15 = inlined_call_operand.vmem [shape: f32[256,16], index: 15, kind: input, shape index: {}]
  %s16 = inlined_call_operand.vmem [shape: f32[16,16], index: 16, kind: output, shape index: {}]
  %s17 = sld [smem:[#allocation0]]
  $region74: #{vgae_encoder_forward.1} parent=0
    _
  %s19 = ssub.s32 1, %s17
  %s20 = scalar_select 0, %s19, %s17
  // Predicated region
  $region2: #{vgae_encoder_forward.1} parent=0 // pred_check
    _
  $region3: #{vgae_encoder_forward.1} parent=0 // pred_check_branch
    %22 = sbr.rel (0) target = $region5
  $region4: #{vgae_encoder_forward.1} parent=0 // pred_region
    _
  $region5: #{vgae_encoder_forward.1} parent=0 // pred_fallthru
    _
  // Predicated region
  $region6: #{vgae_encoder_forward.1} parent=0 // pred_check
    _
  $region7: #{vgae_encoder_forward.1} parent=0 // pred_check_branch
    %24 = sbr.rel (0) target = $region9
  $region8: #{vgae_encoder_forward.1} parent=0 // pred_region
    _
  $region9: #{vgae_encoder_forward.1} parent=0 // pred_fallthru
    _
  // Predicated region
  $region10: #{vgae_encoder_forward.1} parent=0 // pred_check
    _
  $region11: #{vgae_encoder_forward.1} parent=0 // pred_check_branch
    %26 = sbr.rel (0) target = $region13
  $region12: #{vgae_encoder_forward.1} parent=0 // pred_region
    _
  $region13: #{vgae_encoder_forward.1} parent=0 // pred_fallthru
    _
  // Predicated region
  $region14: #{vgae_encoder_forward.1} parent=0 // pred_check
    _
  $region15: #{vgae_encoder_forward.1} parent=0 // pred_check_branch
    %28 = sbr.rel (0) target = $region17
  $region16: #{vgae_encoder_forward.1} parent=0 // pred_region
    _
  $region17: #{vgae_encoder_forward.1} parent=0 // pred_fallthru
    _
  // Predicated region
  $region18: #{vgae_encoder_forward.1} parent=0 // pred_check
    _
  $region19: #{vgae_encoder_forward.1} parent=0 // pred_check_branch
    %30 = sbr.rel (0) target = $region21
  $region20: #{vgae_encoder_forward.1} parent=0 // pred_region
    _
  $region21: #{vgae_encoder_forward.1} parent=0 // pred_fallthru
    _
  // Predicated region
  $region22: #{vgae_encoder_forward.1} parent=0 // pred_check
    _
  $region23: #{vgae_encoder_forward.1} parent=0 // pred_check_branch
    %32 = sbr.rel (0) target = $region25
  $region24: #{vgae_encoder_forward.1} parent=0 // pred_region
    _
  $region25: #{vgae_encoder_forward.1} parent=0 // pred_fallthru
    _
  // Predicated region
  $region26: #{vgae_encoder_forward.1} parent=0 // pred_check
    _
  $region27: #{vgae_encoder_forward.1} parent=0 // pred_check_branch
    %34 = sbr.rel (0) target = $region29
  $region28: #{vgae_encoder_forward.1} parent=0 // pred_region
    _
  $region29: #{vgae_encoder_forward.1} parent=0 // pred_fallthru
    _
  // Predicated region
  $region30: #{vgae_encoder_forward.1} parent=0 // pred_check
    _
  $region31: #{vgae_encoder_forward.1} parent=0 // pred_check_branch
    %36 = sbr.rel (0) target = $region33
  $region32: #{vgae_encoder_forward.1} parent=0 // pred_region
    _
  $region33: #{vgae_encoder_forward.1} parent=0 // pred_fallthru
    _
  // Predicated region
  $region34: #{vgae_encoder_forward.1} parent=0 // pred_check
    _
  $region35: #{vgae_encoder_forward.1} parent=0 // pred_check_branch
    %38 = sbr.rel (0) target = $region37
  $region36: #{vgae_encoder_forward.1} parent=0 // pred_region
    _
  $region37: #{vgae_encoder_forward.1} parent=0 // pred_fallthru
    _
  // Predicated region
  $region38: #{vgae_encoder_forward.1} parent=0 // pred_check
    _
  $region39: #{vgae_encoder_forward.1} parent=0 // pred_check_branch
    %40 = sbr.rel (0) target = $region41
  $region40: #{vgae_encoder_forward.1} parent=0 // pred_region
    _
  $region41: #{vgae_encoder_forward.1} parent=0 // pred_fallthru
    _
  // Predicated region
  $region42: #{vgae_encoder_forward.1} parent=0 // pred_check
    _
  $region43: #{vgae_encoder_forward.1} parent=0 // pred_check_branch
    %42 = sbr.rel (0) target = $region45
  $region44: #{vgae_encoder_forward.1} parent=0 // pred_region
    _
  $region45: #{vgae_encoder_forward.1} parent=0 // pred_fallthru
    _
  // Predicated region
  $region46: #{vgae_encoder_forward.1} parent=0 // pred_check
    _
  $region47: #{vgae_encoder_forward.1} parent=0 // pred_check_branch
    %44 = sbr.rel (0) target = $region49
  $region48: #{vgae_encoder_forward.1} parent=0 // pred_region
    _
  $region49: #{vgae_encoder_forward.1} parent=0 // pred_fallthru
    _
  // Predicated region
  $region50: #{vgae_encoder_forward.1} parent=0 // pred_check
    _
  $region51: #{vgae_encoder_forward.1} parent=0 // pred_check_branch
    %46 = sbr.rel (0) target = $region53
  $region52: #{vgae_encoder_forward.1} parent=0 // pred_region
    _
  $region53: #{vgae_encoder_forward.1} parent=0 // pred_fallthru
    _
  // Predicated region
  $region54: #{vgae_encoder_forward.1} parent=0 // pred_check
    _
  $region55: #{vgae_encoder_forward.1} parent=0 // pred_check_branch
    %48 = sbr.rel (0) target = $region57
  $region56: #{vgae_encoder_forward.1} parent=0 // pred_region
    _
  $region57: #{vgae_encoder_forward.1} parent=0 // pred_fallthru
    _
  // Predicated region
  $region58: #{vgae_encoder_forward.1} parent=0 // pred_check
    _
  $region59: #{vgae_encoder_forward.1} parent=0 // pred_check_branch
    %50 = sbr.rel (0) target = $region61
  $region60: #{vgae_encoder_forward.1} parent=0 // pred_region
    _
  $region61: #{vgae_encoder_forward.1} parent=0 // pred_fallthru
    _
  // Predicated region
  $region62: #{vgae_encoder_forward.1} parent=0 // pred_check
    _
  $region63: #{vgae_encoder_forward.1} parent=0 // pred_check_branch
    %52 = sbr.rel (0) target = $region65
  $region64: #{vgae_encoder_forward.1} parent=0 // pred_region
    _
  $region65: #{vgae_encoder_forward.1} parent=0 // pred_fallthru
    _
  %v53 = vld [vmem:[%s0] sm:$0xff]
  %v54 = vld [vmem:[%s0 + $0x8] sm:$0xff]
  %v55 = vld [vmem:[%s3] sm:$0xff]
  %v56 = vld [vmem:[%s3 + $0x8] sm:$0xff]
  %v57 = vld [vmem:[%s3 + $0x10] sm:$0xff]
  %v58 = vld [vmem:[%s3 + $0x18] sm:$0xff]
  %v59 = vlaneseq
  %v60 = vand.u32 %v59, 127
  %v61 = vld [vmem:[%s1] sm:$0xff]
  %v62 = vld [vmem:[%s1 + $0x8] sm:$0xff]
  %v63 = vld [vmem:[%s1 + $0x10] sm:$0xff]
  %v64 = vld [vmem:[%s1 + $0x18] sm:$0xff]
  %65 = vset.pattern.permute.xlu0 0
  %66 = vperm.xlu0 %65, %v61
  %v67 = vpop.permute.xlu0 %66
  %68 = vset.pattern.permute.xlu0 0
  %69 = vperm.xlu0 %68, %v62
  %v70 = vpop.permute.xlu0 %69
  %71 = vset.pattern.permute.xlu0 0
  %72 = vperm.xlu0 %71, %v63
  %v73 = vpop.permute.xlu0 %72
  %74 = vset.pattern.permute.xlu0 0
  %75 = vperm.xlu0 %74, %v64
  %v76 = vpop.permute.xlu0 %75
  %vm77 = vcmp.eq.s32.totalorder %v60, %v67
  %vm78 = vcmp.eq.s32.totalorder %v60, %v70
  %vm79 = vcmp.eq.s32.totalorder %v60, %v73
  %vm80 = vcmp.eq.s32.totalorder %v60, %v76
  %v81 = vsel %vm77, 1, 0
  %v82 = vsel %vm78, 1, 0
  %v83 = vsel %vm79, 1, 0
  %v84 = vsel %vm80, 1, 0
  %v85 = vcvt.s32.f32 %v81
  %v86 = vcvt.s32.f32 %v82
  %v87 = vcvt.s32.f32 %v83
  %v88 = vcvt.s32.f32 %v84
  %v89 = vlaneseq
  %v90 = vshrl.u32 %v89, 7
  %v91 = vadd.s32 %v90, 8
  %v92 = vld [vmem:[%s2] sm:$0x1]
  %v93 = vlaneseq
  %v94 = vshrl.u32 %v93, 7
  %v95 = vsub.s32 0, %v94
  %v96 = vrot.slane %v92, %v95
  %vm97 = vcmp.eq.s32.totalorder %v90, %v96
  %vm98 = vcmp.eq.s32.totalorder %v91, %v96
  %v99 = vsel %vm97, 1, 0
  %v100 = vsel %vm98, 1, 0
  %v101 = vcvt.s32.f32 %v99
  %v102 = vcvt.s32.f32 %v100
  %vm103 = vcmask 261120
  %v104 = vsel %vm103, %v101, 0.0
  %105 = vadd.xlane.f32.xlu0 %v104
  %v106 = vpop.xlane.xlu0 %105
  %v107 = vsel %vm103, %v102, 0.0
  %108 = vadd.xlane.f32.xlu0 %v107
  %v109 = vpop.xlane.xlu0 %108
  %v110 = vmax.f32 %v106, 1.0
  %v111 = vmax.f32 %v109, 1.0
  %v112 = vrcp.pop %v110
  %v113 = vmul.f32 1.0, %v112
  %v114 = vrcp.pop %v111
  %v115 = vmul.f32 1.0, %v114
  %v116 = vld [vmem:[%s4] sm:$0xf]
  %v117 = vld [vmem:[%s5] sm:$0x1]
  %v119 = vlaneseq
  %v120 = vshrl.u32 %v119, 7
  %v121 = vsub.s32 0, %v120
  %v122 = vrot.slane %v117, %v121
  %vm124 = vcmask 31744
  %v126 = vsel %vm124, %v55, 0
  %v129 = vsel %vm124, %v56, 0
  %v132 = vsel %vm124, %v57, 0
  %v135 = vsel %vm124, %v58, 0
  %vm137 = vcmask 1043456
  %v139 = vsel %vm137, %v116, 0
  %141 = vmatprep.subr.mxu0 0.0
  %142 = vmatpush1.msra.mxu0 0.0
  %143 = vmatprep.subr.mxu0 0.0
  %144 = vmatpush1.msra.mxu0 0.0
  %145 = vmatprep.subr.mxu0 0.0
  %146 = vmatpush1.msra.mxu0 0.0
  %147 = vmatprep.subr.mxu0 0.0
  %148 = vmatpush1.msra.mxu0 0.0
  %149 = vmatprep.subr.mxu0 0.0
  %150 = vmatpush1.msra.mxu0 0.0
  %151 = vmatprep.subr.mxu0 0.0
  %152 = vmatpush1.msra.mxu0 0.0
  %153 = vmatprep.subr.mxu0 0.0
  %154 = vmatpush1.msra.mxu0 0.0
  %155 = vmatprep.subr.mxu0 0.0
  %156 = vmatpush1.msra.mxu0 0.0
  %157 = vmatprep.subr.mxu0 0.0
  %158 = vmatpush1.msra.mxu0 0.0
  %159 = vmatprep.subr.mxu0 0.0
  %160 = vmatpush1.msra.mxu0 0.0
  %161 = vmatprep.subr.mxu0 0.0
  %162 = vmatpush1.msra.mxu0 0.0
  %163 = vmatprep.subr.mxu0 0.0
  %164 = vmatpush1.msra.mxu0 0.0
  %165 = vmatprep.subr.mxu0 0.0
  %166 = vmatpush1.msra.mxu0 0.0
  %167 = vmatprep.subr.mxu0 0.0
  %168 = vmatpush1.msra.mxu0 0.0
  %169 = vmatprep.subr.mxu0 0.0
  %170 = vmatpush1.msra.mxu0 0.0
  %171 = vmatprep.subr.mxu0 0.0
  %172 = vmatpush1.msra.mxu0 %v139
  %173 = vmatprep.subr.mxu0 0.0
  %174 = vmatpush2.msra.mxu0 0.0
  %175 = vmatprep.subr.mxu0 0.0
  %176 = vmatpush2.msra.mxu0 0.0
  %177 = vmatprep.subr.mxu0 0.0
  %178 = vmatpush2.msra.mxu0 0.0
  %179 = vmatprep.subr.mxu0 0.0
  %180 = vmatpush2.msra.mxu0 0.0
  %181 = vmatprep.subr.mxu0 0.0
  %182 = vmatpush2.msra.mxu0 0.0
  %183 = vmatprep.subr.mxu0 0.0
  %184 = vmatpush2.msra.mxu0 0.0
  %185 = vmatprep.subr.mxu0 0.0
  %186 = vmatpush2.msra.mxu0 0.0
  %187 = vmatprep.subr.mxu0 0.0
  %188 = vmatpush2.msra.mxu0 0.0
  %189 = vmatprep.subr.mxu0 0.0
  %190 = vmatpush2.msra.mxu0 0.0
  %191 = vmatprep.subr.mxu0 0.0
  %192 = vmatpush2.msra.mxu0 0.0
  %193 = vmatprep.subr.mxu0 0.0
  %194 = vmatpush2.msra.mxu0 0.0
  %195 = vmatprep.subr.mxu0 0.0
  %196 = vmatpush2.msra.mxu0 0.0
  %197 = vmatprep.subr.mxu0 0.0
  %198 = vmatpush2.msra.mxu0 0.0
  %199 = vmatprep.subr.mxu0 0.0
  %200 = vmatpush2.msra.mxu0 0.0
  %201 = vmatprep.subr.mxu0 0.0
  %202 = vmatpush2.msra.mxu0 0.0
  %203 = vmatprep.subr.mxu0 0.0
  %204 = vmatpush2.msra.mxu0 0.0
  %205 = vmatprep.mubr.f32.mxu0 0.0
  %206 = vmatmul.mubr.f32.gmra.mxu0 %v126
  %v207 = vpop.f32.mrf.mxu0
  %v208 = vadd.f32 %v122, %v207
  %v209 = vpop.f32.mrf.mxu0
  %210 = vmatprep.mubr.f32.mxu0 0.0
  %211 = vmatmul.mubr.f32.gmra.mxu0 %v129
  %v212 = vpop.f32.mrf.mxu0
  %v213 = vadd.f32 %v122, %v212
  %v214 = vpop.f32.mrf.mxu0
  %215 = vmatprep.mubr.f32.mxu0 0.0
  %216 = vmatmul.mubr.f32.gmra.mxu0 %v132
  %v217 = vpop.f32.mrf.mxu0
  %v218 = vadd.f32 %v122, %v217
  %v219 = vpop.f32.mrf.mxu0
  %220 = vmatprep.mubr.f32.mxu0 0.0
  %221 = vmatmul.mubr.f32.gmra.mxu0 %v135
  %v222 = vpop.f32.mrf.mxu0
  %v223 = vadd.f32 %v122, %v222
  %v224 = vpop.f32.mrf.mxu0
  %225 = vdwg.mxu0
  %v226 = vmax.f32 %v208, 0.0
  %v227 = vmax.f32 %v213, 0.0
  %v228 = vmax.f32 %v218, 0.0
  %v229 = vmax.f32 %v223, 0.0
  %v230 = vld [vmem:[%s6] sm:$0xff]
  %v231 = vld [vmem:[%s6 + $0x8] sm:$0xff]
  %v232 = vld [vmem:[%s6 + $0x10] sm:$0xff]
  %v233 = vld [vmem:[%s6 + $0x18] sm:$0xff]
  %v234 = vld [vmem:[%s6 + $0x20] sm:$0xff]
  %v235 = vld [vmem:[%s6 + $0x28] sm:$0xff]
  %v236 = vld [vmem:[%s6 + $0x30] sm:$0xff]
  %v237 = vld [vmem:[%s6 + $0x38] sm:$0xff]
  %v238 = vld [vmem:[%s6 + $0x40] sm:$0xff]
  %v239 = vld [vmem:[%s6 + $0x48] sm:$0xff]
  %v240 = vld [vmem:[%s6 + $0x50] sm:$0xff]
  %v241 = vld [vmem:[%s6 + $0x58] sm:$0xff]
  %v242 = vld [vmem:[%s6 + $0x60] sm:$0xff]
  %v243 = vld [vmem:[%s6 + $0x68] sm:$0xff]
  %v244 = vld [vmem:[%s6 + $0x70] sm:$0xff]
  %v245 = vld [vmem:[%s6 + $0x78] sm:$0xff]
  %v246 = vld [vmem:[%s6 + $0x80] sm:$0xff]
  %v247 = vld [vmem:[%s6 + $0x88] sm:$0xff]
  %v248 = vld [vmem:[%s6 + $0x90] sm:$0xff]
  %v249 = vld [vmem:[%s6 + $0x98] sm:$0xff]
  %v250 = vld [vmem:[%s6 + $0xa0] sm:$0xff]
  %v251 = vld [vmem:[%s6 + $0xa8] sm:$0xff]
  %v252 = vld [vmem:[%s6 + $0xb0] sm:$0xff]
  %v253 = vld [vmem:[%s6 + $0xb8] sm:$0xff]
  %v254 = vld [vmem:[%s6 + $0xc0] sm:$0xff]
  %v255 = vld [vmem:[%s6 + $0xc8] sm:$0xff]
  %v256 = vld [vmem:[%s6 + $0xd0] sm:$0xff]
  %v257 = vld [vmem:[%s6 + $0xd8] sm:$0xff]
  %v258 = vld [vmem:[%s6 + $0xe0] sm:$0xff]
  %v259 = vld [vmem:[%s6 + $0xe8] sm:$0xff]
  %v260 = vld [vmem:[%s6 + $0xf0] sm:$0xff]
  %v261 = vld [vmem:[%s6 + $0xf8] sm:$0xff]
  %v262 = vld [vmem:[%s6 + $0x100] sm:$0xff]
  %v263 = vld [vmem:[%s6 + $0x108] sm:$0xff]
  %v264 = vld [vmem:[%s6 + $0x110] sm:$0xff]
  %v265 = vld [vmem:[%s6 + $0x118] sm:$0xff]
  %v266 = vld [vmem:[%s7] sm:$0x7]
  %v268 = vlaneseq
  %v269 = vshrl.u32 %v268, 7
  %v270 = vsub.s32 0, %v269
  %v271 = vrot.slane %v266, %v270
  %v272 = vlaneseq
  %v273 = vshrl.u32 %v272, 7
  %v274 = vsub.s32 1, %v273
  %v275 = vrot.slane %v266, %v274
  %v276 = vlaneseq
  %v277 = vshrl.u32 %v276, 7
  %v278 = vsub.s32 2, %v277
  %v279 = vrot.slane %v266, %v278
  %vm283 = vcmask 785408
  %v285 = vsel %vm283, %v226, 0
  %v288 = vsel %vm283, %v227, 0
  %v291 = vsel %vm283, %v228, 0
  %v294 = vsel %vm283, %v229, 0
  %296 = vmatprep.subr.mxu0 0.0
  %297 = vmatpush1.msra.mxu0 0.0
  %298 = vmatprep.subr.mxu0 0.0
  %299 = vmatpush1.msra.mxu0 0.0
  %300 = vmatprep.subr.mxu0 0.0
  %301 = vmatpush1.msra.mxu0 0.0
  %302 = vmatprep.subr.mxu0 0.0
  %303 = vmatpush1.msra.mxu0 0.0
  %304 = vmatprep.subr.mxu0 %v264
  %305 = vmatpush1.msra.mxu0 %v263
  %306 = vmatprep.subr.mxu0 %v261
  %307 = vmatpush1.msra.mxu0 %v260
  %308 = vmatprep.subr.mxu0 %v258
  %309 = vmatpush1.msra.mxu0 %v257
  %310 = vmatprep.subr.mxu0 %v255
  %311 = vmatpush1.msra.mxu0 %v254
  %312 = vmatprep.subr.mxu0 %v252
  %313 = vmatpush1.msra.mxu0 %v251
  %314 = vmatprep.subr.mxu0 %v249
  %315 = vmatpush1.msra.mxu0 %v248
  %316 = vmatprep.subr.mxu0 %v246
  %317 = vmatpush1.msra.mxu0 %v245
  %318 = vmatprep.subr.mxu0 %v243
  %319 = vmatpush1.msra.mxu0 %v242
  %320 = vmatprep.subr.mxu0 %v240
  %321 = vmatpush1.msra.mxu0 %v239
  %322 = vmatprep.subr.mxu0 %v237
  %323 = vmatpush1.msra.mxu0 %v236
  %324 = vmatprep.subr.mxu0 %v234
  %325 = vmatpush1.msra.mxu0 %v233
  %326 = vmatprep.subr.mxu0 %v231
  %327 = vmatpush1.msra.mxu0 %v230
  %328 = vmatprep.subr.mxu0 0.0
  %329 = vmatpush2.msra.mxu0 0.0
  %330 = vmatprep.subr.mxu0 0.0
  %331 = vmatpush2.msra.mxu0 0.0
  %332 = vmatprep.subr.mxu0 0.0
  %333 = vmatpush2.msra.mxu0 0.0
  %334 = vmatprep.subr.mxu0 0.0
  %335 = vmatpush2.msra.mxu0 0.0
  %336 = vmatprep.subr.mxu0 0.0
  %337 = vmatpush2.msra.mxu0 0.0
  %338 = vmatprep.subr.mxu0 0.0
  %339 = vmatpush2.msra.mxu0 0.0
  %340 = vmatprep.subr.mxu0 0.0
  %341 = vmatpush2.msra.mxu0 0.0
  %342 = vmatprep.subr.mxu0 0.0
  %343 = vmatpush2.msra.mxu0 0.0
  %344 = vmatprep.subr.mxu0 0.0
  %345 = vmatpush2.msra.mxu0 0.0
  %346 = vmatprep.subr.mxu0 0.0
  %347 = vmatpush2.msra.mxu0 0.0
  %348 = vmatprep.subr.mxu0 0.0
  %349 = vmatpush2.msra.mxu0 0.0
  %350 = vmatprep.subr.mxu0 0.0
  %351 = vmatpush2.msra.mxu0 0.0
  %352 = vmatprep.subr.mxu0 0.0
  %353 = vmatpush2.msra.mxu0 0.0
  %354 = vmatprep.subr.mxu0 0.0
  %355 = vmatpush2.msra.mxu0 0.0
  %356 = vmatprep.subr.mxu0 0.0
  %357 = vmatpush2.msra.mxu0 0.0
  %358 = vmatprep.subr.mxu0 0.0
  %359 = vmatpush2.msra.mxu0 0.0
  %360 = vmatprep.mubr.f32.mxu0 0.0
  %361 = vmatmul.mubr.f32.gmra.mxu0 %v285
  %v362 = vpop.f32.mrf.mxu0
  %v363 = vadd.f32 %v271, %v362
  %v364 = vpop.f32.mrf.mxu0
  %v365 = vadd.f32 %v275, %v364
  %366 = vmatprep.mubr.f32.mxu0 0.0
  %367 = vmatmul.mubr.f32.gmra.mxu0 %v288
  %v368 = vpop.f32.mrf.mxu0
  %v369 = vadd.f32 %v271, %v368
  %v370 = vpop.f32.mrf.mxu0
  %v371 = vadd.f32 %v275, %v370
  %372 = vmatprep.mubr.f32.mxu0 0.0
  %373 = vmatmul.mubr.f32.gmra.mxu0 %v291
  %v374 = vpop.f32.mrf.mxu0
  %v375 = vadd.f32 %v271, %v374
  %v376 = vpop.f32.mrf.mxu0
  %v377 = vadd.f32 %v275, %v376
  %378 = vmatprep.mubr.f32.mxu0 0.0
  %379 = vmatmul.mubr.f32.gmra.mxu0 %v294
  %v380 = vpop.f32.mrf.mxu0
  %v381 = vadd.f32 %v271, %v380
  %v382 = vpop.f32.mrf.mxu0
  %v383 = vadd.f32 %v275, %v382
  %384 = vdwg.mxu0
  %385 = vmatprep.subr.mxu0 0.0
  %386 = vmatpush1.msra.mxu0 0.0
  %387 = vmatprep.subr.mxu0 0.0
  %388 = vmatpush1.msra.mxu0 0.0
  %389 = vmatprep.subr.mxu0 0.0
  %390 = vmatpush1.msra.mxu0 0.0
  %391 = vmatprep.subr.mxu0 0.0
  %392 = vmatpush1.msra.mxu0 0.0
  %393 = vmatprep.subr.mxu0 0.0
  %394 = vmatpush1.msra.mxu0 %v265
  %395 = vmatprep.subr.mxu0 0.0
  %396 = vmatpush1.msra.mxu0 %v262
  %397 = vmatprep.subr.mxu0 0.0
  %398 = vmatpush1.msra.mxu0 %v259
  %399 = vmatprep.subr.mxu0 0.0
  %400 = vmatpush1.msra.mxu0 %v256
  %401 = vmatprep.subr.mxu0 0.0
  %402 = vmatpush1.msra.mxu0 %v253
  %403 = vmatprep.subr.mxu0 0.0
  %404 = vmatpush1.msra.mxu0 %v250
  %405 = vmatprep.subr.mxu0 0.0
  %406 = vmatpush1.msra.mxu0 %v247
  %407 = vmatprep.subr.mxu0 0.0
  %408 = vmatpush1.msra.mxu0 %v244
  %409 = vmatprep.subr.mxu0 0.0
  %410 = vmatpush1.msra.mxu0 %v241
  %411 = vmatprep.subr.mxu0 0.0
  %412 = vmatpush1.msra.mxu0 %v238
  %413 = vmatprep.subr.mxu0 0.0
  %414 = vmatpush1.msra.mxu0 %v235
  %415 = vmatprep.subr.mxu0 0.0
  %416 = vmatpush1.msra.mxu0 %v232
  %417 = vmatprep.subr.mxu0 0.0
  %418 = vmatpush2.msra.mxu0 0.0
  %419 = vmatprep.subr.mxu0 0.0
  %420 = vmatpush2.msra.mxu0 0.0
  %421 = vmatprep.subr.mxu0 0.0
  %422 = vmatpush2.msra.mxu0 0.0
  %423 = vmatprep.subr.mxu0 0.0
  %424 = vmatpush2.msra.mxu0 0.0
  %425 = vmatprep.subr.mxu0 0.0
  %426 = vmatpush2.msra.mxu0 0.0
  %427 = vmatprep.subr.mxu0 0.0
  %428 = vmatpush2.msra.mxu0 0.0
  %429 = vmatprep.subr.mxu0 0.0
  %430 = vmatpush2.msra.mxu0 0.0
  %431 = vmatprep.subr.mxu0 0.0
  %432 = vmatpush2.msra.mxu0 0.0
  %433 = vmatprep.subr.mxu0 0.0
  %434 = vmatpush2.msra.mxu0 0.0
  %435 = vmatprep.subr.mxu0 0.0
  %436 = vmatpush2.msra.mxu0 0.0
  %437 = vmatprep.subr.mxu0 0.0
  %438 = vmatpush2.msra.mxu0 0.0
  %439 = vmatprep.subr.mxu0 0.0
  %440 = vmatpush2.msra.mxu0 0.0
  %441 = vmatprep.subr.mxu0 0.0
  %442 = vmatpush2.msra.mxu0 0.0
  %443 = vmatprep.subr.mxu0 0.0
  %444 = vmatpush2.msra.mxu0 0.0
  %445 = vmatprep.subr.mxu0 0.0
  %446 = vmatpush2.msra.mxu0 0.0
  %447 = vmatprep.subr.mxu0 0.0
  %448 = vmatpush2.msra.mxu0 0.0
  %449 = vmatprep.mubr.f32.mxu0 0.0
  %450 = vmatmul.mubr.f32.gmra.mxu0 %v285
  %v451 = vpop.f32.mrf.mxu0
  %v452 = vadd.f32 %v279, %v451
  %v453 = vpop.f32.mrf.mxu0
  %454 = vmatprep.mubr.f32.mxu0 0.0
  %455 = vmatmul.mubr.f32.gmra.mxu0 %v288
  %v456 = vpop.f32.mrf.mxu0
  %v457 = vadd.f32 %v279, %v456
  %v458 = vpop.f32.mrf.mxu0
  %459 = vmatprep.mubr.f32.mxu0 0.0
  %460 = vmatmul.mubr.f32.gmra.mxu0 %v291
  %v461 = vpop.f32.mrf.mxu0
  %v462 = vadd.f32 %v279, %v461
  %v463 = vpop.f32.mrf.mxu0
  %464 = vmatprep.mubr.f32.mxu0 0.0
  %465 = vmatmul.mubr.f32.gmra.mxu0 %v294
  %v466 = vpop.f32.mrf.mxu0
  %v467 = vadd.f32 %v279, %v466
  %v468 = vpop.f32.mrf.mxu0
  %469 = vdwg.mxu0
  %vm470 = vcmask 130048
  %v472 = vsel %vm470, %v85, 0
  %v475 = vsel %vm470, %v86, 0
  %v478 = vsel %vm470, %v87, 0
  %v481 = vsel %vm470, %v88, 0
  %483 = vmatprep.subr.mxu0 0.0
  %484 = vmatpush1.msra.mxu0 0.0
  %485 = vmatprep.subr.mxu0 0.0
  %486 = vmatpush1.msra.mxu0 0.0
  %487 = vmatprep.subr.mxu0 0.0
  %488 = vmatpush1.msra.mxu0 0.0
  %489 = vmatprep.subr.mxu0 0.0
  %490 = vmatpush1.msra.mxu0 0.0
  %491 = vmatprep.subr.mxu0 0.0
  %492 = vmatpush1.msra.mxu0 0.0
  %493 = vmatprep.subr.mxu0 0.0
  %494 = vmatpush1.msra.mxu0 0.0
  %495 = vmatprep.subr.mxu0 0.0
  %496 = vmatpush1.msra.mxu0 0.0
  %497 = vmatprep.subr.mxu0 0.0
  %498 = vmatpush1.msra.mxu0 0.0
  %499 = vmatprep.subr.mxu0 0.0
  %500 = vmatpush1.msra.mxu0 0.0
  %501 = vmatprep.subr.mxu0 0.0
  %502 = vmatpush1.msra.mxu0 0.0
  %503 = vmatprep.subr.mxu0 0.0
  %504 = vmatpush1.msra.mxu0 0.0
  %505 = vmatprep.subr.mxu0 0.0
  %506 = vmatpush1.msra.mxu0 0.0
  %507 = vmatprep.subr.mxu0 0.0
  %508 = vmatpush1.msra.mxu0 0.0
  %509 = vmatprep.subr.mxu0 0.0
  %510 = vmatpush1.msra.mxu0 0.0
  %511 = vmatprep.subr.mxu0 0.0
  %512 = vmatpush1.msra.mxu0 %v54
  %513 = vmatprep.subr.mxu0 0.0
  %514 = vmatpush1.msra.mxu0 %v53
  %515 = vmatprep.subr.mxu0 0.0
  %516 = vmatpush2.msra.mxu0 0.0
  %517 = vmatprep.subr.mxu0 0.0
  %518 = vmatpush2.msra.mxu0 0.0
  %519 = vmatprep.subr.mxu0 0.0
  %520 = vmatpush2.msra.mxu0 0.0
  %521 = vmatprep.subr.mxu0 0.0
  %522 = vmatpush2.msra.mxu0 0.0
  %523 = vmatprep.subr.mxu0 0.0
  %524 = vmatpush2.msra.mxu0 0.0
  %525 = vmatprep.subr.mxu0 0.0
  %526 = vmatpush2.msra.mxu0 0.0
  %527 = vmatprep.subr.mxu0 0.0
  %528 = vmatpush2.msra.mxu0 0.0
  %529 = vmatprep.subr.mxu0 0.0
  %530 = vmatpush2.msra.mxu0 0.0
  %531 = vmatprep.subr.mxu0 0.0
  %532 = vmatpush2.msra.mxu0 0.0
  %533 = vmatprep.subr.mxu0 0.0
  %534 = vmatpush2.msra.mxu0 0.0
  %535 = vmatprep.subr.mxu0 0.0
  %536 = vmatpush2.msra.mxu0 0.0
  %537 = vmatprep.subr.mxu0 0.0
  %538 = vmatpush2.msra.mxu0 0.0
  %539 = vmatprep.subr.mxu0 0.0
  %540 = vmatpush2.msra.mxu0 0.0
  %541 = vmatprep.subr.mxu0 0.0
  %542 = vmatpush2.msra.mxu0 0.0
  %543 = vmatprep.subr.mxu0 0.0
  %544 = vmatpush2.msra.mxu0 0.0
  %545 = vmatprep.subr.mxu0 0.0
  %546 = vmatpush2.msra.mxu0 0.0
  %547 = vmatprep.mubr.f32.mxu0 0.0
  %548 = vmatmul.mubr.f32.gmra.mxu0 %v472
  %v549 = vpop.f32.mrf.mxu0
  %v550 = vadd.f32 0.0, %v549
  %v551 = vpop.f32.mrf.mxu0
  %552 = vmatprep.mubr.f32.mxu0 0.0
  %553 = vmatmul.mubr.f32.gmra.mxu0 %v475
  %v554 = vpop.f32.mrf.mxu0
  %v555 = vadd.f32 0.0, %v554
  %v556 = vpop.f32.mrf.mxu0
  %557 = vmatprep.mubr.f32.mxu0 0.0
  %558 = vmatmul.mubr.f32.gmra.mxu0 %v478
  %v559 = vpop.f32.mrf.mxu0
  %v560 = vadd.f32 0.0, %v559
  %v561 = vpop.f32.mrf.mxu0
  %562 = vmatprep.mubr.f32.mxu0 0.0
  %563 = vmatmul.mubr.f32.gmra.mxu0 %v481
  %v564 = vpop.f32.mrf.mxu0
  %v565 = vadd.f32 0.0, %v564
  %v566 = vpop.f32.mrf.mxu0
  %567 = vdwg.mxu0
  %v568 = vld [vmem:[%s10] sm:$0xff]
  %vm569 = vcmask 64512
  %v571 = vsel %vm569, %v550, 0
  %v574 = vsel %vm569, %v555, 0
  %v577 = vsel %vm569, %v560, 0
  %v580 = vsel %vm569, %v565, 0
  %582 = vmatprep.subr.mxu0 0.0
  %583 = vmatpush1.msra.mxu0 0.0
  %584 = vmatprep.subr.mxu0 0.0
  %585 = vmatpush1.msra.mxu0 0.0
  %586 = vmatprep.subr.mxu0 0.0
  %587 = vmatpush1.msra.mxu0 0.0
  %588 = vmatprep.subr.mxu0 0.0
  %589 = vmatpush1.msra.mxu0 0.0
  %590 = vmatprep.subr.mxu0 0.0
  %591 = vmatpush1.msra.mxu0 0.0
  %592 = vmatprep.subr.mxu0 0.0
  %593 = vmatpush1.msra.mxu0 0.0
  %594 = vmatprep.subr.mxu0 0.0
  %595 = vmatpush1.msra.mxu0 0.0
  %596 = vmatprep.subr.mxu0 0.0
  %597 = vmatpush1.msra.mxu0 0.0
  %598 = vmatprep.subr.mxu0 0.0
  %599 = vmatpush1.msra.mxu0 0.0
  %600 = vmatprep.subr.mxu0 0.0
  %601 = vmatpush1.msra.mxu0 0.0
  %602 = vmatprep.subr.mxu0 0.0
  %603 = vmatpush1.msra.mxu0 0.0
  %604 = vmatprep.subr.mxu0 0.0
  %605 = vmatpush1.msra.mxu0 0.0
  %606 = vmatprep.subr.mxu0 0.0
  %607 = vmatpush1.msra.mxu0 0.0
  %608 = vmatprep.subr.mxu0 0.0
  %609 = vmatpush1.msra.mxu0 0.0
  %610 = vmatprep.subr.mxu0 0.0
  %611 = vmatpush1.msra.mxu0 0.0
  %612 = vmatprep.subr.mxu0 0.0
  %613 = vmatpush1.msra.mxu0 %v568
  %614 = vmatprep.subr.mxu0 0.0
  %615 = vmatpush2.msra.mxu0 0.0
  %616 = vmatprep.subr.mxu0 0.0
  %617 = vmatpush2.msra.mxu0 0.0
  %618 = vmatprep.subr.mxu0 0.0
  %619 = vmatpush2.msra.mxu0 0.0
  %620 = vmatprep.subr.mxu0 0.0
  %621 = vmatpush2.msra.mxu0 0.0
  %622 = vmatprep.subr.mxu0 0.0
  %623 = vmatpush2.msra.mxu0 0.0
  %624 = vmatprep.subr.mxu0 0.0
  %625 = vmatpush2.msra.mxu0 0.0
  %626 = vmatprep.subr.mxu0 0.0
  %627 = vmatpush2.msra.mxu0 0.0
  %628 = vmatprep.subr.mxu0 0.0
  %629 = vmatpush2.msra.mxu0 0.0
  %630 = vmatprep.subr.mxu0 0.0
  %631 = vmatpush2.msra.mxu0 0.0
  %632 = vmatprep.subr.mxu0 0.0
  %633 = vmatpush2.msra.mxu0 0.0
  %634 = vmatprep.subr.mxu0 0.0
  %635 = vmatpush2.msra.mxu0 0.0
  %636 = vmatprep.subr.mxu0 0.0
  %637 = vmatpush2.msra.mxu0 0.0
  %638 = vmatprep.subr.mxu0 0.0
  %639 = vmatpush2.msra.mxu0 0.0
  %640 = vmatprep.subr.mxu0 0.0
  %641 = vmatpush2.msra.mxu0 0.0
  %642 = vmatprep.subr.mxu0 0.0
  %643 = vmatpush2.msra.mxu0 0.0
  %644 = vmatprep.subr.mxu0 0.0
  %645 = vmatpush2.msra.mxu0 0.0
  %646 = vmatprep.mubr.f32.mxu0 0.0
  %647 = vmatmul.mubr.f32.gmra.mxu0 %v571
  %v648 = vpop.f32.mrf.mxu0
  %v649 = vadd.f32 0.0, %v648
  %v650 = vpop.f32.mrf.mxu0
  %651 = vmatprep.mubr.f32.mxu0 0.0
  %652 = vmatmul.mubr.f32.gmra.mxu0 %v574
  %v653 = vpop.f32.mrf.mxu0
  %v654 = vadd.f32 0.0, %v653
  %v655 = vpop.f32.mrf.mxu0
  %656 = vmatprep.mubr.f32.mxu0 0.0
  %657 = vmatmul.mubr.f32.gmra.mxu0 %v577
  %v658 = vpop.f32.mrf.mxu0
  %v659 = vadd.f32 0.0, %v658
  %v660 = vpop.f32.mrf.mxu0
  %661 = vmatprep.mubr.f32.mxu0 0.0
  %662 = vmatmul.mubr.f32.gmra.mxu0 %v580
  %v663 = vpop.f32.mrf.mxu0
  %v664 = vadd.f32 0.0, %v663
  %v665 = vpop.f32.mrf.mxu0
  %666 = vdwg.mxu0
  %v667 = vmul.f32 %v649, %v363
  %v668 = vmul.f32 %v654, %v369
  %v669 = vmul.f32 %v659, %v375
  %v670 = vmul.f32 %v664, %v381
  %v671 = vld [vmem:[%s11] sm:$0xff]
  %v672 = vld [vmem:[%s11 + $0x8] sm:$0xff]
  %v673 = vld [vmem:[%s11 + $0x10] sm:$0xff]
  %v674 = vld [vmem:[%s11 + $0x18] sm:$0xff]
  %v675 = vld [vmem:[%s11 + $0x20] sm:$0xff]
  %v676 = vld [vmem:[%s11 + $0x28] sm:$0xff]
  %v677 = vld [vmem:[%s11 + $0x30] sm:$0xff]
  %v678 = vld [vmem:[%s11 + $0x38] sm:$0xff]
  %v679 = vld [vmem:[%s11 + $0x40] sm:$0xff]
  %v680 = vld [vmem:[%s11 + $0x48] sm:$0xff]
  %v681 = vld [vmem:[%s11 + $0x50] sm:$0xff]
  %v682 = vld [vmem:[%s11 + $0x58] sm:$0xff]
  %v683 = vld [vmem:[%s11 + $0x60] sm:$0xff]
  %v684 = vld [vmem:[%s11 + $0x68] sm:$0xff]
  %v685 = vld [vmem:[%s11 + $0x70] sm:$0xff]
  %v686 = vld [vmem:[%s11 + $0x78] sm:$0xff]
  %687 = vmatprep.subr.mxu0 0.0
  %688 = vmatpush1.msra.mxu0 %v686
  %689 = vmatprep.subr.mxu0 0.0
  %690 = vmatpush1.msra.mxu0 %v685
  %691 = vmatprep.subr.mxu0 0.0
  %692 = vmatpush1.msra.mxu0 %v684
  %693 = vmatprep.subr.mxu0 0.0
  %694 = vmatpush1.msra.mxu0 %v683
  %695 = vmatprep.subr.mxu0 0.0
  %696 = vmatpush1.msra.mxu0 %v682
  %697 = vmatprep.subr.mxu0 0.0
  %698 = vmatpush1.msra.mxu0 %v681
  %699 = vmatprep.subr.mxu0 0.0
  %700 = vmatpush1.msra.mxu0 %v680
  %701 = vmatprep.subr.mxu0 0.0
  %702 = vmatpush1.msra.mxu0 %v679
  %703 = vmatprep.subr.mxu0 0.0
  %704 = vmatpush1.msra.mxu0 %v678
  %705 = vmatprep.subr.mxu0 0.0
  %706 = vmatpush1.msra.mxu0 %v677
  %707 = vmatprep.subr.mxu0 0.0
  %708 = vmatpush1.msra.mxu0 %v676
  %709 = vmatprep.subr.mxu0 0.0
  %710 = vmatpush1.msra.mxu0 %v675
  %711 = vmatprep.subr.mxu0 0.0
  %712 = vmatpush1.msra.mxu0 %v674
  %713 = vmatprep.subr.mxu0 0.0
  %714 = vmatpush1.msra.mxu0 %v673
  %715 = vmatprep.subr.mxu0 0.0
  %716 = vmatpush1.msra.mxu0 %v672
  %717 = vmatprep.subr.mxu0 0.0
  %718 = vmatpush1.msra.mxu0 %v671
  %719 = vmatprep.subr.mxu0 0.0
  %720 = vmatpush2.msra.mxu0 0.0
  %721 = vmatprep.subr.mxu0 0.0
  %722 = vmatpush2.msra.mxu0 0.0
  %723 = vmatprep.subr.mxu0 0.0
  %724 = vmatpush2.msra.mxu0 0.0
  %725 = vmatprep.subr.mxu0 0.0
  %726 = vmatpush2.msra.mxu0 0.0
  %727 = vmatprep.subr.mxu0 0.0
  %728 = vmatpush2.msra.mxu0 0.0
  %729 = vmatprep.subr.mxu0 0.0
  %730 = vmatpush2.msra.mxu0 0.0
  %731 = vmatprep.subr.mxu0 0.0
  %732 = vmatpush2.msra.mxu0 0.0
  %733 = vmatprep.subr.mxu0 0.0
  %734 = vmatpush2.msra.mxu0 0.0
  %735 = vmatprep.subr.mxu0 0.0
  %736 = vmatpush2.msra.mxu0 0.0
  %737 = vmatprep.subr.mxu0 0.0
  %738 = vmatpush2.msra.mxu0 0.0
  %739 = vmatprep.subr.mxu0 0.0
  %740 = vmatpush2.msra.mxu0 0.0
  %741 = vmatprep.subr.mxu0 0.0
  %742 = vmatpush2.msra.mxu0 0.0
  %743 = vmatprep.subr.mxu0 0.0
  %744 = vmatpush2.msra.mxu0 0.0
  %745 = vmatprep.subr.mxu0 0.0
  %746 = vmatpush2.msra.mxu0 0.0
  %747 = vmatprep.subr.mxu0 0.0
  %748 = vmatpush2.msra.mxu0 0.0
  %749 = vmatprep.subr.mxu0 0.0
  %750 = vmatpush2.msra.mxu0 0.0
  %751 = vmatprep.mubr.f32.mxu0 0.0
  %752 = vmatmul.mubr.f32.gmra.mxu0 %v667
  %v753 = vpop.f32.mrf.mxu0
  %v754 = vadd.f32 0.0, %v753
  %v755 = vpop.f32.mrf.mxu0
  %756 = vmatprep.mubr.f32.mxu0 0.0
  %757 = vmatmul.mubr.f32.gmra.mxu0 %v668
  %v758 = vpop.f32.mrf.mxu0
  %v759 = vadd.f32 0.0, %v758
  %v760 = vpop.f32.mrf.mxu0
  %761 = vmatprep.mubr.f32.mxu0 0.0
  %762 = vmatmul.mubr.f32.gmra.mxu0 %v669
  %v763 = vpop.f32.mrf.mxu0
  %v764 = vadd.f32 0.0, %v763
  %v765 = vpop.f32.mrf.mxu0
  %766 = vmatprep.mubr.f32.mxu0 0.0
  %767 = vmatmul.mubr.f32.gmra.mxu0 %v670
  %v768 = vpop.f32.mrf.mxu0
  %v769 = vadd.f32 0.0, %v768
  %v770 = vpop.f32.mrf.mxu0
  %771 = vdwg.mxu0
  %v773 = vsel %vm103, %v101, 0
  %v776 = vsel %vm103, %v102, 0
  %778 = vmatprep.subr.mxu0 0.0
  %779 = vmatpush1.msra.mxu0 0.0
  %780 = vmatprep.subr.mxu0 0.0
  %781 = vmatpush1.msra.mxu0 0.0
  %782 = vmatprep.subr.mxu0 0.0
  %783 = vmatpush1.msra.mxu0 0.0
  %784 = vmatprep.subr.mxu0 0.0
  %785 = vmatpush1.msra.mxu0 0.0
  %786 = vmatprep.subr.mxu0 0.0
  %787 = vmatpush1.msra.mxu0 0.0
  %788 = vmatprep.subr.mxu0 0.0
  %789 = vmatpush1.msra.mxu0 0.0
  %790 = vmatprep.subr.mxu0 0.0
  %791 = vmatpush1.msra.mxu0 0.0
  %792 = vmatprep.subr.mxu0 0.0
  %793 = vmatpush1.msra.mxu0 0.0
  %794 = vmatprep.subr.mxu0 0.0
  %795 = vmatpush1.msra.mxu0 0.0
  %796 = vmatprep.subr.mxu0 0.0
  %797 = vmatpush1.msra.mxu0 0.0
  %798 = vmatprep.subr.mxu0 0.0
  %799 = vmatpush1.msra.mxu0 0.0
  %800 = vmatprep.subr.mxu0 0.0
  %801 = vmatpush1.msra.mxu0 0.0
  %802 = vmatprep.subr.mxu0 0.0
  %803 = vmatpush1.msra.mxu0 %v769
  %804 = vmatprep.subr.mxu0 0.0
  %805 = vmatpush1.msra.mxu0 %v764
  %806 = vmatprep.subr.mxu0 0.0
  %807 = vmatpush1.msra.mxu0 %v759
  %808 = vmatprep.subr.mxu0 0.0
  %809 = vmatpush1.msra.mxu0 %v754
  %810 = vmatprep.subr.mxu0 0.0
  %811 = vmatpush2.msra.mxu0 0.0
  %812 = vmatprep.subr.mxu0 0.0
  %813 = vmatpush2.msra.mxu0 0.0
  %814 = vmatprep.subr.mxu0 0.0
  %815 = vmatpush2.msra.mxu0 0.0
  %816 = vmatprep.subr.mxu0 0.0
  %817 = vmatpush2.msra.mxu0 0.0
  %818 = vmatprep.subr.mxu0 0.0
  %819 = vmatpush2.msra.mxu0 0.0
  %820 = vmatprep.subr.mxu0 0.0
  %821 = vmatpush2.msra.mxu0 0.0
  %822 = vmatprep.subr.mxu0 0.0
  %823 = vmatpush2.msra.mxu0 0.0
  %824 = vmatprep.subr.mxu0 0.0
  %825 = vmatpush2.msra.mxu0 0.0
  %826 = vmatprep.subr.mxu0 0.0
  %827 = vmatpush2.msra.mxu0 0.0
  %828 = vmatprep.subr.mxu0 0.0
  %829 = vmatpush2.msra.mxu0 0.0
  %830 = vmatprep.subr.mxu0 0.0
  %831 = vmatpush2.msra.mxu0 0.0
  %832 = vmatprep.subr.mxu0 0.0
  %833 = vmatpush2.msra.mxu0 0.0
  %834 = vmatprep.subr.mxu0 0.0
  %835 = vmatpush2.msra.mxu0 0.0
  %836 = vmatprep.subr.mxu0 0.0
  %837 = vmatpush2.msra.mxu0 0.0
  %838 = vmatprep.subr.mxu0 0.0
  %839 = vmatpush2.msra.mxu0 0.0
  %840 = vmatprep.subr.mxu0 0.0
  %841 = vmatpush2.msra.mxu0 0.0
  %842 = vmatprep.mubr.f32.mxu0 0.0
  %843 = vmatmul.mubr.f32.gmra.mxu0 %v773
  %v844 = vpop.f32.mrf.mxu0
  %v845 = vadd.f32 0.0, %v844
  %v846 = vpop.f32.mrf.mxu0
  %847 = vmatprep.mubr.f32.mxu0 0.0
  %848 = vmatmul.mubr.f32.gmra.mxu0 %v776
  %v849 = vpop.f32.mrf.mxu0
  %v850 = vadd.f32 0.0, %v849
  %v851 = vpop.f32.mrf.mxu0
  %852 = vdwg.mxu0
  %v853 = vmul.f32 %v845, %v113
  %v854 = vmul.f32 %v850, %v115
  %v855 = vld [vmem:[%s8] sm:$0xff]
  %v857 = vsel %vm569, %v53, 0
  %v860 = vsel %vm569, %v54, 0
  %862 = vmatprep.subr.mxu0 0.0
  %863 = vmatpush1.msra.mxu0 0.0
  %864 = vmatprep.subr.mxu0 0.0
  %865 = vmatpush1.msra.mxu0 0.0
  %866 = vmatprep.subr.mxu0 0.0
  %867 = vmatpush1.msra.mxu0 0.0
  %868 = vmatprep.subr.mxu0 0.0
  %869 = vmatpush1.msra.mxu0 0.0
  %870 = vmatprep.subr.mxu0 0.0
  %871 = vmatpush1.msra.mxu0 0.0
  %872 = vmatprep.subr.mxu0 0.0
  %873 = vmatpush1.msra.mxu0 0.0
  %874 = vmatprep.subr.mxu0 0.0
  %875 = vmatpush1.msra.mxu0 0.0
  %876 = vmatprep.subr.mxu0 0.0
  %877 = vmatpush1.msra.mxu0 0.0
  %878 = vmatprep.subr.mxu0 0.0
  %879 = vmatpush1.msra.mxu0 0.0
  %880 = vmatprep.subr.mxu0 0.0
  %881 = vmatpush1.msra.mxu0 0.0
  %882 = vmatprep.subr.mxu0 0.0
  %883 = vmatpush1.msra.mxu0 0.0
  %884 = vmatprep.subr.mxu0 0.0
  %885 = vmatpush1.msra.mxu0 0.0
  %886 = vmatprep.subr.mxu0 0.0
  %887 = vmatpush1.msra.mxu0 0.0
  %888 = vmatprep.subr.mxu0 0.0
  %889 = vmatpush1.msra.mxu0 0.0
  %890 = vmatprep.subr.mxu0 0.0
  %891 = vmatpush1.msra.mxu0 0.0
  %892 = vmatprep.subr.mxu0 0.0
  %893 = vmatpush1.msra.mxu0 %v855
  %894 = vmatprep.subr.mxu0 0.0
  %895 = vmatpush2.msra.mxu0 0.0
  %896 = vmatprep.subr.mxu0 0.0
  %897 = vmatpush2.msra.mxu0 0.0
  %898 = vmatprep.subr.mxu0 0.0
  %899 = vmatpush2.msra.mxu0 0.0
  %900 = vmatprep.subr.mxu0 0.0
  %901 = vmatpush2.msra.mxu0 0.0
  %902 = vmatprep.subr.mxu0 0.0
  %903 = vmatpush2.msra.mxu0 0.0
  %904 = vmatprep.subr.mxu0 0.0
  %905 = vmatpush2.msra.mxu0 0.0
  %906 = vmatprep.subr.mxu0 0.0
  %907 = vmatpush2.msra.mxu0 0.0
  %908 = vmatprep.subr.mxu0 0.0
  %909 = vmatpush2.msra.mxu0 0.0
  %910 = vmatprep.subr.mxu0 0.0
  %911 = vmatpush2.msra.mxu0 0.0
  %912 = vmatprep.subr.mxu0 0.0
  %913 = vmatpush2.msra.mxu0 0.0
  %914 = vmatprep.subr.mxu0 0.0
  %915 = vmatpush2.msra.mxu0 0.0
  %916 = vmatprep.subr.mxu0 0.0
  %917 = vmatpush2.msra.mxu0 0.0
  %918 = vmatprep.subr.mxu0 0.0
  %919 = vmatpush2.msra.mxu0 0.0
  %920 = vmatprep.subr.mxu0 0.0
  %921 = vmatpush2.msra.mxu0 0.0
  %922 = vmatprep.subr.mxu0 0.0
  %923 = vmatpush2.msra.mxu0 0.0
  %924 = vmatprep.subr.mxu0 0.0
  %925 = vmatpush2.msra.mxu0 0.0
  %926 = vmatprep.mubr.f32.mxu0 0.0
  %927 = vmatmul.mubr.f32.gmra.mxu0 %v857
  %v928 = vpop.f32.mrf.mxu0
  %v929 = vadd.f32 0.0, %v928
  %v930 = vpop.f32.mrf.mxu0
  %931 = vmatprep.mubr.f32.mxu0 0.0
  %932 = vmatmul.mubr.f32.gmra.mxu0 %v860
  %v933 = vpop.f32.mrf.mxu0
  %v934 = vadd.f32 0.0, %v933
  %v935 = vpop.f32.mrf.mxu0
  %936 = vdwg.mxu0
  %v937 = vadd.f32 %v853, %v929
  %v938 = vadd.f32 %v854, %v934
  %v939 = vld [vmem:[%s9] sm:$0x1]
  %v941 = vlaneseq
  %v942 = vshrl.u32 %v941, 7
  %v943 = vsub.s32 0, %v942
  %v944 = vrot.slane %v939, %v943
  %v946 = vadd.f32 %v937, %v944
  %v947 = vadd.f32 %v938, %v944
  %v948 = vmax.f32 %v946, 0.0
  %v949 = vmax.f32 %v947, 0.0
  %950 = vmatprep.subr.mxu0 0.0
  %951 = vmatpush1.msra.mxu0 0.0
  %952 = vmatprep.subr.mxu0 0.0
  %953 = vmatpush1.msra.mxu0 0.0
  %954 = vmatprep.subr.mxu0 0.0
  %955 = vmatpush1.msra.mxu0 0.0
  %956 = vmatprep.subr.mxu0 0.0
  %957 = vmatpush1.msra.mxu0 0.0
  %958 = vmatprep.subr.mxu0 0.0
  %959 = vmatpush1.msra.mxu0 0.0
  %960 = vmatprep.subr.mxu0 0.0
  %961 = vmatpush1.msra.mxu0 0.0
  %962 = vmatprep.subr.mxu0 0.0
  %963 = vmatpush1.msra.mxu0 0.0
  %964 = vmatprep.subr.mxu0 0.0
  %965 = vmatpush1.msra.mxu0 0.0
  %966 = vmatprep.subr.mxu0 0.0
  %967 = vmatpush1.msra.mxu0 0.0
  %968 = vmatprep.subr.mxu0 0.0
  %969 = vmatpush1.msra.mxu0 0.0
  %970 = vmatprep.subr.mxu0 0.0
  %971 = vmatpush1.msra.mxu0 0.0
  %972 = vmatprep.subr.mxu0 0.0
  %973 = vmatpush1.msra.mxu0 0.0
  %974 = vmatprep.subr.mxu0 0.0
  %975 = vmatpush1.msra.mxu0 0.0
  %976 = vmatprep.subr.mxu0 0.0
  %977 = vmatpush1.msra.mxu0 0.0
  %978 = vmatprep.subr.mxu0 0.0
  %979 = vmatpush1.msra.mxu0 %v949
  %980 = vmatprep.subr.mxu0 0.0
  %981 = vmatpush1.msra.mxu0 %v948
  %982 = vmatprep.subr.mxu0 0.0
  %983 = vmatpush2.msra.mxu0 0.0
  %984 = vmatprep.subr.mxu0 0.0
  %985 = vmatpush2.msra.mxu0 0.0
  %986 = vmatprep.subr.mxu0 0.0
  %987 = vmatpush2.msra.mxu0 0.0
  %988 = vmatprep.subr.mxu0 0.0
  %989 = vmatpush2.msra.mxu0 0.0
  %990 = vmatprep.subr.mxu0 0.0
  %991 = vmatpush2.msra.mxu0 0.0
  %992 = vmatprep.subr.mxu0 0.0
  %993 = vmatpush2.msra.mxu0 0.0
  %994 = vmatprep.subr.mxu0 0.0
  %995 = vmatpush2.msra.mxu0 0.0
  %996 = vmatprep.subr.mxu0 0.0
  %997 = vmatpush2.msra.mxu0 0.0
  %998 = vmatprep.subr.mxu0 0.0
  %999 = vmatpush2.msra.mxu0 0.0
  %1000 = vmatprep.subr.mxu0 0.0
  %1001 = vmatpush2.msra.mxu0 0.0
  %1002 = vmatprep.subr.mxu0 0.0
  %1003 = vmatpush2.msra.mxu0 0.0
  %1004 = vmatprep.subr.mxu0 0.0
  %1005 = vmatpush2.msra.mxu0 0.0
  %1006 = vmatprep.subr.mxu0 0.0
  %1007 = vmatpush2.msra.mxu0 0.0
  %1008 = vmatprep.subr.mxu0 0.0
  %1009 = vmatpush2.msra.mxu0 0.0
  %1010 = vmatprep.subr.mxu0 0.0
  %1011 = vmatpush2.msra.mxu0 0.0
  %1012 = vmatprep.subr.mxu0 0.0
  %1013 = vmatpush2.msra.mxu0 0.0
  %1014 = vmatprep.mubr.f32.mxu0 0.0
  %1015 = vmatmul.mubr.f32.gmra.mxu0 %v472
  %v1016 = vpop.f32.mrf.mxu0
  %v1017 = vadd.f32 0.0, %v1016
  %v1018 = vpop.f32.mrf.mxu0
  %1019 = vmatprep.mubr.f32.mxu0 0.0
  %1020 = vmatmul.mubr.f32.gmra.mxu0 %v475
  %v1021 = vpop.f32.mrf.mxu0
  %v1022 = vadd.f32 0.0, %v1021
  %v1023 = vpop.f32.mrf.mxu0
  %1024 = vmatprep.mubr.f32.mxu0 0.0
  %1025 = vmatmul.mubr.f32.gmra.mxu0 %v478
  %v1026 = vpop.f32.mrf.mxu0
  %v1027 = vadd.f32 0.0, %v1026
  %v1028 = vpop.f32.mrf.mxu0
  %1029 = vmatprep.mubr.f32.mxu0 0.0
  %1030 = vmatmul.mubr.f32.gmra.mxu0 %v481
  %v1031 = vpop.f32.mrf.mxu0
  %v1032 = vadd.f32 0.0, %v1031
  %v1033 = vpop.f32.mrf.mxu0
  %1034 = vdwg.mxu0
  %v1035 = vld [vmem:[%s14] sm:$0xff]
  %v1036 = vld [vmem:[%s14 + $0x8] sm:$0xff]
  %v1037 = vld [vmem:[%s14 + $0x10] sm:$0xff]
  %v1038 = vld [vmem:[%s14 + $0x18] sm:$0xff]
  %v1040 = vsel %vm470, %v1017, 0
  %v1043 = vsel %vm470, %v1022, 0
  %v1046 = vsel %vm470, %v1027, 0
  %v1049 = vsel %vm470, %v1032, 0
  %1051 = vmatprep.subr.mxu0 0.0
  %1052 = vmatpush1.msra.mxu0 0.0
  %1053 = vmatprep.subr.mxu0 0.0
  %1054 = vmatpush1.msra.mxu0 0.0
  %1055 = vmatprep.subr.mxu0 0.0
  %1056 = vmatpush1.msra.mxu0 0.0
  %1057 = vmatprep.subr.mxu0 0.0
  %1058 = vmatpush1.msra.mxu0 0.0
  %1059 = vmatprep.subr.mxu0 0.0
  %1060 = vmatpush1.msra.mxu0 0.0
  %1061 = vmatprep.subr.mxu0 0.0
  %1062 = vmatpush1.msra.mxu0 0.0
  %1063 = vmatprep.subr.mxu0 0.0
  %1064 = vmatpush1.msra.mxu0 0.0
  %1065 = vmatprep.subr.mxu0 0.0
  %1066 = vmatpush1.msra.mxu0 0.0
  %1067 = vmatprep.subr.mxu0 0.0
  %1068 = vmatpush1.msra.mxu0 0.0
  %1069 = vmatprep.subr.mxu0 0.0
  %1070 = vmatpush1.msra.mxu0 0.0
  %1071 = vmatprep.subr.mxu0 0.0
  %1072 = vmatpush1.msra.mxu0 0.0
  %1073 = vmatprep.subr.mxu0 0.0
  %1074 = vmatpush1.msra.mxu0 0.0
  %1075 = vmatprep.subr.mxu0 0.0
  %1076 = vmatpush1.msra.mxu0 0.0
  %1077 = vmatprep.subr.mxu0 0.0
  %1078 = vmatpush1.msra.mxu0 0.0
  %1079 = vmatprep.subr.mxu0 %v1038
  %1080 = vmatpush1.msra.mxu0 %v1037
  %1081 = vmatprep.subr.mxu0 %v1036
  %1082 = vmatpush1.msra.mxu0 %v1035
  %1083 = vmatprep.subr.mxu0 0.0
  %1084 = vmatpush2.msra.mxu0 0.0
  %1085 = vmatprep.subr.mxu0 0.0
  %1086 = vmatpush2.msra.mxu0 0.0
  %1087 = vmatprep.subr.mxu0 0.0
  %1088 = vmatpush2.msra.mxu0 0.0
  %1089 = vmatprep.subr.mxu0 0.0
  %1090 = vmatpush2.msra.mxu0 0.0
  %1091 = vmatprep.subr.mxu0 0.0
  %1092 = vmatpush2.msra.mxu0 0.0
  %1093 = vmatprep.subr.mxu0 0.0
  %1094 = vmatpush2.msra.mxu0 0.0
  %1095 = vmatprep.subr.mxu0 0.0
  %1096 = vmatpush2.msra.mxu0 0.0
  %1097 = vmatprep.subr.mxu0 0.0
  %1098 = vmatpush2.msra.mxu0 0.0
  %1099 = vmatprep.subr.mxu0 0.0
  %1100 = vmatpush2.msra.mxu0 0.0
  %1101 = vmatprep.subr.mxu0 0.0
  %1102 = vmatpush2.msra.mxu0 0.0
  %1103 = vmatprep.subr.mxu0 0.0
  %1104 = vmatpush2.msra.mxu0 0.0
  %1105 = vmatprep.subr.mxu0 0.0
  %1106 = vmatpush2.msra.mxu0 0.0
  %1107 = vmatprep.subr.mxu0 0.0
  %1108 = vmatpush2.msra.mxu0 0.0
  %1109 = vmatprep.subr.mxu0 0.0
  %1110 = vmatpush2.msra.mxu0 0.0
  %1111 = vmatprep.subr.mxu0 0.0
  %1112 = vmatpush2.msra.mxu0 0.0
  %1113 = vmatprep.subr.mxu0 0.0
  %1114 = vmatpush2.msra.mxu0 0.0
  %1115 = vmatprep.mubr.f32.mxu0 0.0
  %1116 = vmatmul.mubr.f32.gmra.mxu0 %v1040
  %v1117 = vpop.f32.mrf.mxu0
  %v1118 = vadd.f32 0.0, %v1117
  %v1119 = vpop.f32.mrf.mxu0
  %v1120 = vadd.f32 0.0, %v1119
  %1121 = vmatprep.mubr.f32.mxu0 0.0
  %1122 = vmatmul.mubr.f32.gmra.mxu0 %v1043
  %v1123 = vpop.f32.mrf.mxu0
  %v1124 = vadd.f32 0.0, %v1123
  %v1125 = vpop.f32.mrf.mxu0
  %v1126 = vadd.f32 0.0, %v1125
  %1127 = vmatprep.mubr.f32.mxu0 0.0
  %1128 = vmatmul.mubr.f32.gmra.mxu0 %v1046
  %v1129 = vpop.f32.mrf.mxu0
  %v1130 = vadd.f32 0.0, %v1129
  %v1131 = vpop.f32.mrf.mxu0
  %v1132 = vadd.f32 0.0, %v1131
  %1133 = vmatprep.mubr.f32.mxu0 0.0
  %1134 = vmatmul.mubr.f32.gmra.mxu0 %v1049
  %v1135 = vpop.f32.mrf.mxu0
  %v1136 = vadd.f32 0.0, %v1135
  %v1137 = vpop.f32.mrf.mxu0
  %v1138 = vadd.f32 0.0, %v1137
  %1139 = vdwg.mxu0
  %v1140 = vmul.f32 %v1118, %v365
  %v1141 = vmul.f32 %v1120, %v452
  %v1142 = vmul.f32 %v1124, %v371
  %v1143 = vmul.f32 %v1126, %v457
  %v1144 = vmul.f32 %v1130, %v377
  %v1145 = vmul.f32 %v1132, %v462
  %v1146 = vmul.f32 %v1136, %v383
  %v1147 = vmul.f32 %v1138, %v467
  %v1148 = vld [vmem:[%s15] sm:$0xff]
  %v1149 = vld [vmem:[%s15 + $0x8] sm:$0xff]
  %v1150 = vld [vmem:[%s15 + $0x10] sm:$0xff]
  %v1151 = vld [vmem:[%s15 + $0x18] sm:$0xff]
  %v1152 = vld [vmem:[%s15 + $0x20] sm:$0xff]
  %v1153 = vld [vmem:[%s15 + $0x28] sm:$0xff]
  %v1154 = vld [vmem:[%s15 + $0x30] sm:$0xff]
  %v1155 = vld [vmem:[%s15 + $0x38] sm:$0xff]
  %v1156 = vld [vmem:[%s15 + $0x40] sm:$0xff]
  %v1157 = vld [vmem:[%s15 + $0x48] sm:$0xff]
  %v1158 = vld [vmem:[%s15 + $0x50] sm:$0xff]
  %v1159 = vld [vmem:[%s15 + $0x58] sm:$0xff]
  %v1160 = vld [vmem:[%s15 + $0x60] sm:$0xff]
  %v1161 = vld [vmem:[%s15 + $0x68] sm:$0xff]
  %v1162 = vld [vmem:[%s15 + $0x70] sm:$0xff]
  %v1163 = vld [vmem:[%s15 + $0x78] sm:$0xff]
  %v1164 = vld [vmem:[%s15 + $0x80] sm:$0xff]
  %v1165 = vld [vmem:[%s15 + $0x88] sm:$0xff]
  %v1166 = vld [vmem:[%s15 + $0x90] sm:$0xff]
  %v1167 = vld [vmem:[%s15 + $0x98] sm:$0xff]
  %v1168 = vld [vmem:[%s15 + $0xa0] sm:$0xff]
  %v1169 = vld [vmem:[%s15 + $0xa8] sm:$0xff]
  %v1170 = vld [vmem:[%s15 + $0xb0] sm:$0xff]
  %v1171 = vld [vmem:[%s15 + $0xb8] sm:$0xff]
  %v1172 = vld [vmem:[%s15 + $0xc0] sm:$0xff]
  %v1173 = vld [vmem:[%s15 + $0xc8] sm:$0xff]
  %v1174 = vld [vmem:[%s15 + $0xd0] sm:$0xff]
  %v1175 = vld [vmem:[%s15 + $0xd8] sm:$0xff]
  %v1176 = vld [vmem:[%s15 + $0xe0] sm:$0xff]
  %v1177 = vld [vmem:[%s15 + $0xe8] sm:$0xff]
  %v1178 = vld [vmem:[%s15 + $0xf0] sm:$0xff]
  %v1179 = vld [vmem:[%s15 + $0xf8] sm:$0xff]
  %1180 = vmatprep.subr.mxu0 0.0
  %1181 = vmatpush1.msra.mxu0 %v1163
  %1182 = vmatprep.subr.mxu0 0.0
  %1183 = vmatpush1.msra.mxu0 %v1162
  %1184 = vmatprep.subr.mxu0 0.0
  %1185 = vmatpush1.msra.mxu0 %v1161
  %1186 = vmatprep.subr.mxu0 0.0
  %1187 = vmatpush1.msra.mxu0 %v1160
  %1188 = vmatprep.subr.mxu0 0.0
  %1189 = vmatpush1.msra.mxu0 %v1159
  %1190 = vmatprep.subr.mxu0 0.0
  %1191 = vmatpush1.msra.mxu0 %v1158
  %1192 = vmatprep.subr.mxu0 0.0
  %1193 = vmatpush1.msra.mxu0 %v1157
  %1194 = vmatprep.subr.mxu0 0.0
  %1195 = vmatpush1.msra.mxu0 %v1156
  %1196 = vmatprep.subr.mxu0 0.0
  %1197 = vmatpush1.msra.mxu0 %v1155
  %1198 = vmatprep.subr.mxu0 0.0
  %1199 = vmatpush1.msra.mxu0 %v1154
  %1200 = vmatprep.subr.mxu0 0.0
  %1201 = vmatpush1.msra.mxu0 %v1153
  %1202 = vmatprep.subr.mxu0 0.0
  %1203 = vmatpush1.msra.mxu0 %v1152
  %1204 = vmatprep.subr.mxu0 0.0
  %1205 = vmatpush1.msra.mxu0 %v1151
  %1206 = vmatprep.subr.mxu0 0.0
  %1207 = vmatpush1.msra.mxu0 %v1150
  %1208 = vmatprep.subr.mxu0 0.0
  %1209 = vmatpush1.msra.mxu0 %v1149
  %1210 = vmatprep.subr.mxu0 0.0
  %1211 = vmatpush1.msra.mxu0 %v1148
  %1212 = vmatprep.subr.mxu0 0.0
  %1213 = vmatpush2.msra.mxu0 %v1179
  %1214 = vmatprep.subr.mxu0 0.0
  %1215 = vmatpush2.msra.mxu0 %v1178
  %1216 = vmatprep.subr.mxu0 0.0
  %1217 = vmatpush2.msra.mxu0 %v1177
  %1218 = vmatprep.subr.mxu0 0.0
  %1219 = vmatpush2.msra.mxu0 %v1176
  %1220 = vmatprep.subr.mxu0 0.0
  %1221 = vmatpush2.msra.mxu0 %v1175
  %1222 = vmatprep.subr.mxu0 0.0
  %1223 = vmatpush2.msra.mxu0 %v1174
  %1224 = vmatprep.subr.mxu0 0.0
  %1225 = vmatpush2.msra.mxu0 %v1173
  %1226 = vmatprep.subr.mxu0 0.0
  %1227 = vmatpush2.msra.mxu0 %v1172
  %1228 = vmatprep.subr.mxu0 0.0
  %1229 = vmatpush2.msra.mxu0 %v1171
  %1230 = vmatprep.subr.mxu0 0.0
  %1231 = vmatpush2.msra.mxu0 %v1170
  %1232 = vmatprep.subr.mxu0 0.0
  %1233 = vmatpush2.msra.mxu0 %v1169
  %1234 = vmatprep.subr.mxu0 0.0
  %1235 = vmatpush2.msra.mxu0 %v1168
  %1236 = vmatprep.subr.mxu0 0.0
  %1237 = vmatpush2.msra.mxu0 %v1167
  %1238 = vmatprep.subr.mxu0 0.0
  %1239 = vmatpush2.msra.mxu0 %v1166
  %1240 = vmatprep.subr.mxu0 0.0
  %1241 = vmatpush2.msra.mxu0 %v1165
  %1242 = vmatprep.subr.mxu0 0.0
  %1243 = vmatpush2.msra.mxu0 %v1164
  %1244 = vmatprep.mubr.f32.mxu0 %v1141
  %1245 = vmatmul.mubr.f32.gmra.mxu0 %v1140
  %v1246 = vpop.f32.mrf.mxu0
  %v1247 = vadd.f32 0.0, %v1246
  %v1248 = vpop.f32.mrf.mxu0
  %1249 = vmatprep.mubr.f32.mxu0 %v1143
  %1250 = vmatmul.mubr.f32.gmra.mxu0 %v1142
  %v1251 = vpop.f32.mrf.mxu0
  %v1252 = vadd.f32 0.0, %v1251
  %v1253 = vpop.f32.mrf.mxu0
  %1254 = vmatprep.mubr.f32.mxu0 %v1145
  %1255 = vmatmul.mubr.f32.gmra.mxu0 %v1144
  %v1256 = vpop.f32.mrf.mxu0
  %v1257 = vadd.f32 0.0, %v1256
  %v1258 = vpop.f32.mrf.mxu0
  %1259 = vmatprep.mubr.f32.mxu0 %v1147
  %1260 = vmatmul.mubr.f32.gmra.mxu0 %v1146
  %v1261 = vpop.f32.mrf.mxu0
  %v1262 = vadd.f32 0.0, %v1261
  %v1263 = vpop.f32.mrf.mxu0
  %1264 = vdwg.mxu0
  %v1265 = vld [vmem:[%s12] sm:$0xff]
  %v1266 = vld [vmem:[%s12 + $0x8] sm:$0xff]
  %v1268 = vsel %vm470, %v948, 0
  %v1271 = vsel %vm470, %v949, 0
  %1273 = vmatprep.subr.mxu0 0.0
  %1274 = vmatpush1.msra.mxu0 0.0
  %1275 = vmatprep.subr.mxu0 0.0
  %1276 = vmatpush1.msra.mxu0 0.0
  %1277 = vmatprep.subr.mxu0 0.0
  %1278 = vmatpush1.msra.mxu0 0.0
  %1279 = vmatprep.subr.mxu0 0.0
  %1280 = vmatpush1.msra.mxu0 0.0
  %1281 = vmatprep.subr.mxu0 0.0
  %1282 = vmatpush1.msra.mxu0 0.0
  %1283 = vmatprep.subr.mxu0 0.0
  %1284 = vmatpush1.msra.mxu0 0.0
  %1285 = vmatprep.subr.mxu0 0.0
  %1286 = vmatpush1.msra.mxu0 0.0
  %1287 = vmatprep.subr.mxu0 0.0
  %1288 = vmatpush1.msra.mxu0 0.0
  %1289 = vmatprep.subr.mxu0 0.0
  %1290 = vmatpush1.msra.mxu0 0.0
  %1291 = vmatprep.subr.mxu0 0.0
  %1292 = vmatpush1.msra.mxu0 0.0
  %1293 = vmatprep.subr.mxu0 0.0
  %1294 = vmatpush1.msra.mxu0 0.0
  %1295 = vmatprep.subr.mxu0 0.0
  %1296 = vmatpush1.msra.mxu0 0.0
  %1297 = vmatprep.subr.mxu0 0.0
  %1298 = vmatpush1.msra.mxu0 0.0
  %1299 = vmatprep.subr.mxu0 0.0
  %1300 = vmatpush1.msra.mxu0 0.0
  %1301 = vmatprep.subr.mxu0 0.0
  %1302 = vmatpush1.msra.mxu0 %v1266
  %1303 = vmatprep.subr.mxu0 0.0
  %1304 = vmatpush1.msra.mxu0 %v1265
  %1305 = vmatprep.subr.mxu0 0.0
  %1306 = vmatpush2.msra.mxu0 0.0
  %1307 = vmatprep.subr.mxu0 0.0
  %1308 = vmatpush2.msra.mxu0 0.0
  %1309 = vmatprep.subr.mxu0 0.0
  %1310 = vmatpush2.msra.mxu0 0.0
  %1311 = vmatprep.subr.mxu0 0.0
  %1312 = vmatpush2.msra.mxu0 0.0
  %1313 = vmatprep.subr.mxu0 0.0
  %1314 = vmatpush2.msra.mxu0 0.0
  %1315 = vmatprep.subr.mxu0 0.0
  %1316 = vmatpush2.msra.mxu0 0.0
  %1317 = vmatprep.subr.mxu0 0.0
  %1318 = vmatpush2.msra.mxu0 0.0
  %1319 = vmatprep.subr.mxu0 0.0
  %1320 = vmatpush2.msra.mxu0 0.0
  %1321 = vmatprep.subr.mxu0 0.0
  %1322 = vmatpush2.msra.mxu0 0.0
  %1323 = vmatprep.subr.mxu0 0.0
  %1324 = vmatpush2.msra.mxu0 0.0
  %1325 = vmatprep.subr.mxu0 0.0
  %1326 = vmatpush2.msra.mxu0 0.0
  %1327 = vmatprep.subr.mxu0 0.0
  %1328 = vmatpush2.msra.mxu0 0.0
  %1329 = vmatprep.subr.mxu0 0.0
  %1330 = vmatpush2.msra.mxu0 0.0
  %1331 = vmatprep.subr.mxu0 0.0
  %1332 = vmatpush2.msra.mxu0 0.0
  %1333 = vmatprep.subr.mxu0 0.0
  %1334 = vmatpush2.msra.mxu0 0.0
  %1335 = vmatprep.subr.mxu0 0.0
  %1336 = vmatpush2.msra.mxu0 0.0
  %1337 = vmatprep.mubr.f32.mxu0 0.0
  %1338 = vmatmul.mubr.f32.gmra.mxu0 %v1268
  %v1339 = vpop.f32.mrf.mxu0
  %v1340 = vadd.f32 0.0, %v1339
  %v1341 = vpop.f32.mrf.mxu0
  %1342 = vmatprep.mubr.f32.mxu0 0.0
  %1343 = vmatmul.mubr.f32.gmra.mxu0 %v1271
  %v1344 = vpop.f32.mrf.mxu0
  %v1345 = vadd.f32 0.0, %v1344
  %v1346 = vpop.f32.mrf.mxu0
  %1347 = vdwg.mxu0
  %1348 = vmatprep.subr.mxu0 0.0
  %1349 = vmatpush1.msra.mxu0 0.0
  %1350 = vmatprep.subr.mxu0 0.0
  %1351 = vmatpush1.msra.mxu0 0.0
  %1352 = vmatprep.subr.mxu0 0.0
  %1353 = vmatpush1.msra.mxu0 0.0
  %1354 = vmatprep.subr.mxu0 0.0
  %1355 = vmatpush1.msra.mxu0 0.0
  %1356 = vmatprep.subr.mxu0 0.0
  %1357 = vmatpush1.msra.mxu0 0.0
  %1358 = vmatprep.subr.mxu0 0.0
  %1359 = vmatpush1.msra.mxu0 0.0
  %1360 = vmatprep.subr.mxu0 0.0
  %1361 = vmatpush1.msra.mxu0 0.0
  %1362 = vmatprep.subr.mxu0 0.0
  %1363 = vmatpush1.msra.mxu0 0.0
  %1364 = vmatprep.subr.mxu0 0.0
  %1365 = vmatpush1.msra.mxu0 0.0
  %1366 = vmatprep.subr.mxu0 0.0
  %1367 = vmatpush1.msra.mxu0 0.0
  %1368 = vmatprep.subr.mxu0 0.0
  %1369 = vmatpush1.msra.mxu0 0.0
  %1370 = vmatprep.subr.mxu0 0.0
  %1371 = vmatpush1.msra.mxu0 0.0
  %1372 = vmatprep.subr.mxu0 0.0
  %1373 = vmatpush1.msra.mxu0 %v1262
  %1374 = vmatprep.subr.mxu0 0.0
  %1375 = vmatpush1.msra.mxu0 %v1257
  %1376 = vmatprep.subr.mxu0 0.0
  %1377 = vmatpush1.msra.mxu0 %v1252
  %1378 = vmatprep.subr.mxu0 0.0
  %1379 = vmatpush1.msra.mxu0 %v1247
  %1380 = vmatprep.subr.mxu0 0.0
  %1381 = vmatpush2.msra.mxu0 0.0
  %1382 = vmatprep.subr.mxu0 0.0
  %1383 = vmatpush2.msra.mxu0 0.0
  %1384 = vmatprep.subr.mxu0 0.0
  %1385 = vmatpush2.msra.mxu0 0.0
  %1386 = vmatprep.subr.mxu0 0.0
  %1387 = vmatpush2.msra.mxu0 0.0
  %1388 = vmatprep.subr.mxu0 0.0
  %1389 = vmatpush2.msra.mxu0 0.0
  %1390 = vmatprep.subr.mxu0 0.0
  %1391 = vmatpush2.msra.mxu0 0.0
  %1392 = vmatprep.subr.mxu0 0.0
  %1393 = vmatpush2.msra.mxu0 0.0
  %1394 = vmatprep.subr.mxu0 0.0
  %1395 = vmatpush2.msra.mxu0 0.0
  %1396 = vmatprep.subr.mxu0 0.0
  %1397 = vmatpush2.msra.mxu0 0.0
  %1398 = vmatprep.subr.mxu0 0.0
  %1399 = vmatpush2.msra.mxu0 0.0
  %1400 = vmatprep.subr.mxu0 0.0
  %1401 = vmatpush2.msra.mxu0 0.0
  %1402 = vmatprep.subr.mxu0 0.0
  %1403 = vmatpush2.msra.mxu0 0.0
  %1404 = vmatprep.subr.mxu0 0.0
  %1405 = vmatpush2.msra.mxu0 0.0
  %1406 = vmatprep.subr.mxu0 0.0
  %1407 = vmatpush2.msra.mxu0 0.0
  %1408 = vmatprep.subr.mxu0 0.0
  %1409 = vmatpush2.msra.mxu0 0.0
  %1410 = vmatprep.subr.mxu0 0.0
  %1411 = vmatpush2.msra.mxu0 0.0
  %1412 = vmatprep.mubr.f32.mxu0 0.0
  %1413 = vmatmul.mubr.f32.gmra.mxu0 %v773
  %v1414 = vpop.f32.mrf.mxu0
  %v1415 = vadd.f32 %v1340, %v1414
  %v1416 = vpop.f32.mrf.mxu0
  %1417 = vmatprep.mubr.f32.mxu0 0.0
  %1418 = vmatmul.mubr.f32.gmra.mxu0 %v776
  %v1419 = vpop.f32.mrf.mxu0
  %v1420 = vadd.f32 %v1345, %v1419
  %v1421 = vpop.f32.mrf.mxu0
  %1422 = vdwg.mxu0
  %v1423 = vld [vmem:[%s13] sm:$0x1]
  %v1425 = vlaneseq
  %v1426 = vshrl.u32 %v1425, 7
  %v1427 = vsub.s32 0, %v1426
  %v1428 = vrot.slane %v1423, %v1427
  %v1430 = vadd.f32 %v1415, %v1428
  %v1431 = vadd.f32 %v1420, %v1428
  %1432 = vst.msk [vmem:[%s16] sm:$0xff] %vm470, %v1430
  %1433 = vst.msk [vmem:[%s16 + $0x8] sm:$0xff] %vm470, %v1431
  // Predicated region
  $region66: #{vgae_encoder_forward.1} parent=0 // pred_check
    _
  $region67: #{vgae_encoder_forward.1} parent=0 // pred_check_branch
    %1435 = sbr.rel (0) target = $region69
  $region68: #{vgae_encoder_forward.1} parent=0 // pred_region
    _
  $region69: #{vgae_encoder_forward.1} parent=0 // pred_fallthru
    _
  // Predicated region
  $region70: #{vgae_encoder_forward.1} parent=0 // pred_check
    _
  $region71: #{vgae_encoder_forward.1} parent=0 // pred_check_branch
    %1437 = sbr.rel (0) target = $region73
  $region72: #{vgae_encoder_forward.1} parent=0 // pred_region
    _
  $region73: #{vgae_encoder_forward.1} parent=0 // pred_fallthru
    _

</llo_original>
